<compile_context>
chip_gen: v6e
topology: v6e:2x2x1
jax: 0.10.0
libtpu: 0.0.40
codegen_flags: <defaults>
</compile_context>

<pallas_src>
import jax
import jax.numpy as jnp
from jax.experimental import pallas as pl
from jax.experimental.pallas import tpu as pltpu


LN_EPS = 1e-5

# Row indices inside the stacked (8, d) vector operand.
_BV, _BO, _B2, _G1, _BE1, _G2, _BE2 = range(7)


def _layernorm(x, gamma, beta):
    # Two-pass LN (numerically stable; matches nn.LayerNorm semantics).
    mu = jnp.mean(x, axis=-1, keepdims=True)
    xc = x - mu
    var = jnp.mean(xc * xc, axis=-1, keepdims=True)
    return xc * jax.lax.rsqrt(var + LN_EPS) * gamma + beta


def cross_attn_kernel(q_ref, k_ref, a_ref,
                      wv_ref, wo_ref, w1_ref, w2_ref,
                      b1_ref, vec_ref,
                      o_ref):
    # One grid step == G (batch*n) slices.
    G, Sq, d = q_ref.shape
    Sk = k_ref.shape[1]

    # Leading-dim merges only (last dim unchanged -> no lane relayout).
    q = q_ref[...].astype(jnp.float32).reshape(G * Sq, d)
    k = k_ref[...].astype(jnp.float32).reshape(G * Sk, d)
    a = a_ref[...].astype(jnp.float32)                      # (G, Sq, Sk)

    bv = vec_ref[_BV:_BV + 1, :]
    bo = vec_ref[_BO:_BO + 1, :]
    b2 = vec_ref[_B2:_B2 + 1, :]
    g1 = vec_ref[_G1:_G1 + 1, :]
    be1 = vec_ref[_BE1:_BE1 + 1, :]
    g2 = vec_ref[_G2:_G2 + 1, :]
    be2 = vec_ref[_BE2:_BE2 + 1, :]

    # value = linear_attn_v(key): one tall matmul over all G*Sk key tokens.
    value = jnp.dot(k, wv_ref[...], preferred_element_type=jnp.float32) + bv
    value = value.reshape(G, Sk, d)                         # leading-dim split

    # pre_feature = bmm(atten_map, value), batched over G.
    # Unrolled VPU broadcast-FMA over the (static, small) Sk axis instead of
    # G separate (Sq,Sk)@(Sk,d) MXU matmuls with per-g result drains.
    pre = a[:, :, 0:1] * value[:, 0:1, :]                   # (G, Sq, d)
    for s in range(1, Sk):
        pre = pre + a[:, :, s:s + 1] * value[:, s:s + 1, :]
    pre = pre.reshape(G * Sq, d)

    # pre_feature = linear_attn_out(pre_feature)
    pre = jnp.dot(pre, wo_ref[...], preferred_element_type=jnp.float32) + bo

    # query = norm1(query + dropout1(pre_feature))   (dropout = identity, eval)
    x = _layernorm(q + pre, g1, be1)

    # query2 = linear2(dropout2(relu(linear1(query))))
    h = jnp.dot(x, w1_ref[...], preferred_element_type=jnp.float32) + b1_ref[...]
    h = jnp.maximum(h, 0.0)
    y2 = jnp.dot(h, w2_ref[...], preferred_element_type=jnp.float32) + b2

    # query = norm2(query + dropout3(query2))
    y = _layernorm(x + y2, g2, be2)

    o_ref[...] = y.reshape(G, Sq, d).astype(o_ref.dtype)


def _round_up(x, m):
    return ((x + m - 1) // m) * m


def _choose_group(BN, Sq, Sk, d, target_rows=2048, block_vmem_budget=16 << 20):
    """Pick slices-per-step G and the number of grid steps.

    G is made large enough that (a) the ~0.35us/step pipeline overhead is
    amortized and (b) every Linear's M dimension (G*Sq rows) fills the MXU,
    while the double-buffered lane-padded input/output blocks stay inside a
    VMEM budget that is safe on every TPU generation.  No forced multi-step
    split: on single-TensorCore chips (v5e/v6e) extra steps are pure
    overhead; a single fat step is only split in two (for v7x megacore) when
    each half keeps >= 256 matmul rows.
    """
    lane_pad = lambda c: _round_up(c, 128)
    # Padded f32 VMEM bytes per (batch*n) slice: query + output + key + atten.
    per_slice = 4 * (Sq * lane_pad(d) * 2
                     + Sk * lane_pad(d)
                     + Sq * lane_pad(Sk))
    g_vmem = max(1, block_vmem_budget // (2 * per_slice))       # double-buffered
    g_max = max(1, min(target_rows // max(Sq, 1), g_vmem))

    steps = pl.cdiv(BN, g_max)
    if steps == 1 and (BN * Sq) // 2 >= 256:
        steps = 2                        # v7x megacore: both halves stay fat
    G = pl.cdiv(BN, steps)
    if G >= 8:
        G = _round_up(G, 8)              # keep G*Sq a multiple of 8 sublanes
    steps = pl.cdiv(BN, G)
    return G, steps


def cross_attention_layer(query, key, atten_map, params):
    """query/key: (B, n, Sq, d) or (BN, Sq, d); atten_map matching."""
    orig_4d = query.ndim == 4
    if orig_4d:
        batch_size = query.shape[0]
        query = query.reshape(-1, query.shape[-2], query.shape[-1])
        key = key.reshape(-1, key.shape[-2], key.shape[-1])
        atten_map = atten_map.reshape(-1, atten_map.shape[-2], atten_map.shape[-1])

    BN, Sq, d = query.shape
    Sk = key.shape[-2]
    dff = params["w1"].shape[-1]

    wv, wo, w1, w2, b1 = (params["wv"], params["wo"], params["w1"],
                          params["w2"], params["b1"])
    # Stack the seven (1, d) vectors into a single (8, d) operand (pad row 7).
    vecs = jnp.concatenate(
        [params["bv"], params["bo"], params["b2"], params["g1"],
         params["be1"], params["g2"], params["be2"],
         jnp.zeros((1, d), query.dtype)], axis=0)

    G, steps = _choose_group(BN, Sq, Sk, d)
    BN_pad = G * steps
    if BN_pad != BN:
        # Padded tail slices run LayerNorm on near-constant rows (benign;
        # their outputs are sliced off below).
        pad = BN_pad - BN
        query = jnp.pad(query, ((0, pad), (0, 0), (0, 0)))
        key = jnp.pad(key, ((0, pad), (0, 0), (0, 0)))
        atten_map = jnp.pad(atten_map, ((0, pad), (0, 0), (0, 0)))

    batch_spec = lambda shape: pl.BlockSpec((G,) + shape, lambda b: (b, 0, 0))
    const_spec = lambda shape: pl.BlockSpec(shape, lambda b: (0,) * len(shape))

    # Advisory cost estimate for the XLA scheduler.
    flops = 2 * BN_pad * (Sk * d * d            # linear_attn_v
                          + Sq * Sk * d         # bmm(atten_map, value)
                          + Sq * d * d          # linear_attn_out
                          + Sq * d * dff        # linear1
                          + Sq * dff * d)       # linear2
    transcendentals = 2 * BN_pad * Sq           # two rsqrt per token row
    bytes_accessed = 4 * (BN_pad * (2 * Sq * d + Sk * d + Sq * Sk)
                          + 2 * d * d + 2 * d * dff + 8 * d + dff)

    out = pl.pallas_call(
        cross_attn_kernel,
        out_shape=jax.ShapeDtypeStruct((BN_pad, Sq, d), query.dtype),
        grid_spec=pl.GridSpec(
            grid=(steps,),
            in_specs=[
                batch_spec((Sq, d)),     # query
                batch_spec((Sk, d)),     # key
                batch_spec((Sq, Sk)),    # atten_map
                const_spec((d, d)),      # wv
                const_spec((d, d)),      # wo
                const_spec((d, dff)),    # w1
                const_spec((dff, d)),    # w2
                const_spec((1, dff)),    # b1
                const_spec((8, d)),      # stacked bv/bo/b2/g1/be1/g2/be2
            ],
            out_specs=pl.BlockSpec((G, Sq, d), lambda b: (b, 0, 0)),
        ),
        compiler_params=pltpu.CompilerParams(
            dimension_semantics=("parallel",),
            vmem_limit_bytes=48 * 1024 * 1024),
        cost_estimate=pl.CostEstimate(flops=flops,
                                      transcendentals=transcendentals,
                                      bytes_accessed=bytes_accessed),
    )(query, key, atten_map, wv, wo, w1, w2, b1, vecs)

    out = out[:BN]
    if orig_4d:
        out = out.reshape(batch_size, -1, Sq, d)
    return out


def reference(query, key, atten_map, params):
    """Pure-JAX reference mirroring the PyTorch forward (eval mode)."""
    orig_4d = query.ndim == 4
    if orig_4d:
        bs = query.shape[0]
        query = query.reshape(-1, query.shape[-2], query.shape[-1])
        key = key.reshape(-1, key.shape[-2], key.shape[-1])
        atten_map = atten_map.reshape(-1, atten_map.shape[-2], atten_map.shape[-1])
    value = key @ params["wv"] + params["bv"]
    pre = jnp.einsum("bqk,bkd->bqd", atten_map, value)
    pre = pre @ params["wo"] + params["bo"]
    x = query + pre
    mu = x.mean(-1, keepdims=True)
    var = ((x - mu) ** 2).mean(-1, keepdims=True)
    x = (x - mu) / jnp.sqrt(var + LN_EPS) * params["g1"] + params["be1"]
    h = jnp.maximum(x @ params["w1"] + params["b1"], 0.0)
    y2 = h @ params["w2"] + params["b2"]
    y = x + y2
    mu = y.mean(-1, keepdims=True)
    var = ((y - mu) ** 2).mean(-1, keepdims=True)
    y = (y - mu) / jnp.sqrt(var + LN_EPS) * params["g2"] + params["be2"]
    if orig_4d:
        y = y.reshape(bs, -1, y.shape[-2], y.shape[-1])
    return y


def init_params(key, d_model, dim_feedforward):
    ks = jax.random.split(key, 8)

    def lin(k, fan_in, fan_out):
        bound = 1.0 / jnp.sqrt(fan_in)
        kw, kb = jax.random.split(k)
        w = jax.random.uniform(kw, (fan_in, fan_out), jnp.float32, -bound, bound)
        b = jax.random.uniform(kb, (1, fan_out), jnp.float32, -bound, bound)
        return w, b

    wv, bv = lin(ks[0], d_model, d_model)
    wo, bo = lin(ks[1], d_model, d_model)
    w1, b1 = lin(ks[2], d_model, dim_feedforward)
    w2, b2 = lin(ks[3], dim_feedforward, d_model)
    return dict(
        wv=wv, bv=bv, wo=wo, bo=bo, w1=w1, b1=b1, w2=w2, b2=b2,
        g1=jnp.ones((1, d_model), jnp.float32),
        be1=jnp.zeros((1, d_model), jnp.float32),
        g2=jnp.ones((1, d_model), jnp.float32),
        be2=jnp.zeros((1, d_model), jnp.float32),
    )


if __name__ == "__main__":
    d_model = 32
    dim_feedforward = 64
    B, n, Sq, Sk = 2, 3, 8, 8

    root = jax.random.PRNGKey(0)
    kq, kk, ka, kp = jax.random.split(root, 4)
    query = jax.random.normal(kq, (B, n, Sq, d_model), jnp.float32)
    key = jax.random.normal(kk, (B, n, Sk, d_model), jnp.float32)
    atten_map = jax.nn.softmax(
        jax.random.normal(ka, (B, n, Sq, Sk), jnp.float32), axis=-1)
    params = init_params(kp, d_model, dim_feedforward)

    out = cross_attention_layer(query, key, atten_map, params)
    out = jax.block_until_ready(out)

    ref = reference(query, key, atten_map, params)
    assert out.shape == (B, n, Sq, d_model)
    assert jnp.allclose(out, ref, atol=1e-4, rtol=1e-4), "mismatch vs reference"
    print("KERNEL_OK")
</pallas_src>

<mosaic_0001>
module attributes {stable_mosaic.version = 11 : i64} {
  func.func @cross_attn_kernel(%arg0: i32, %arg1: memref<6x8x32xf32, #tpu.memory_space<vmem>>, %arg2: memref<6x8x32xf32, #tpu.memory_space<vmem>>, %arg3: memref<6x8x8xf32, #tpu.memory_space<vmem>>, %arg4: memref<32x32xf32, #tpu.memory_space<vmem>>, %arg5: memref<32x32xf32, #tpu.memory_space<vmem>>, %arg6: memref<32x64xf32, #tpu.memory_space<vmem>>, %arg7: memref<64x32xf32, #tpu.memory_space<vmem>>, %arg8: memref<1x64xf32, #tpu.memory_space<vmem>>, %arg9: memref<8x32xf32, #tpu.memory_space<vmem>>, %arg10: memref<6x8x32xf32, #tpu.memory_space<vmem>>) attributes {dimension_semantics = [#tpu.dimension_semantics<parallel>], iteration_bounds = array<i64: 1>, scalar_prefetch = 0 : i64, scratch_operands = 0 : i64, tpu.core_type = #tpu.core_type<tc>, window_params = [{transform_indices = @transform_0, window_bounds = array<i64: 6, 8, 32>}, {transform_indices = @transform_1, window_bounds = array<i64: 6, 8, 32>}, {transform_indices = @transform_2, window_bounds = array<i64: 6, 8, 8>}, {pipeline_mode = #tpu.pipeline_mode<synchronous>, transform_indices = @transform_3, window_bounds = array<i64: 32, 32>}, {pipeline_mode = #tpu.pipeline_mode<synchronous>, transform_indices = @transform_4, window_bounds = array<i64: 32, 32>}, {pipeline_mode = #tpu.pipeline_mode<synchronous>, transform_indices = @transform_5, window_bounds = array<i64: 32, 64>}, {pipeline_mode = #tpu.pipeline_mode<synchronous>, transform_indices = @transform_6, window_bounds = array<i64: 64, 32>}, {pipeline_mode = #tpu.pipeline_mode<synchronous>, transform_indices = @transform_7, window_bounds = array<i64: 1, 64>}, {pipeline_mode = #tpu.pipeline_mode<synchronous>, transform_indices = @transform_8, window_bounds = array<i64: 8, 32>}, {transform_indices = @transform_9, window_bounds = array<i64: 6, 8, 32>}]} {
    %c0 = arith.constant 0 : index
    %c0_0 = arith.constant 0 : index
    %c0_1 = arith.constant 0 : index
    %0 = vector.load %arg1[%c0, %c0_0, %c0_1] : memref<6x8x32xf32, #tpu.memory_space<vmem>>, vector<6x8x32xf32>
    %1 = vector.shape_cast %0 : vector<6x8x32xf32> to vector<48x32xf32>
    %c0_2 = arith.constant 0 : index
    %c0_3 = arith.constant 0 : index
    %c0_4 = arith.constant 0 : index
    %2 = vector.load %arg2[%c0_2, %c0_3, %c0_4] : memref<6x8x32xf32, #tpu.memory_space<vmem>>, vector<6x8x32xf32>
    %3 = vector.shape_cast %2 : vector<6x8x32xf32> to vector<48x32xf32>
    %c0_5 = arith.constant 0 : index
    %c0_6 = arith.constant 0 : index
    %c0_7 = arith.constant 0 : index
    %4 = vector.load %arg3[%c0_5, %c0_6, %c0_7] : memref<6x8x8xf32, #tpu.memory_space<vmem>>, vector<6x8x8xf32>
    %c0_8 = arith.constant 0 : index
    %c0_9 = arith.constant 0 : index
    %5 = vector.load %arg9[%c0_8, %c0_9] : memref<8x32xf32, #tpu.memory_space<vmem>>, vector<1x32xf32>
    %c1 = arith.constant 1 : index
    %c0_10 = arith.constant 0 : index
    %6 = vector.load %arg9[%c1, %c0_10] : memref<8x32xf32, #tpu.memory_space<vmem>>, vector<1x32xf32>
    %c2 = arith.constant 2 : index
    %c0_11 = arith.constant 0 : index
    %7 = vector.load %arg9[%c2, %c0_11] : memref<8x32xf32, #tpu.memory_space<vmem>>, vector<1x32xf32>
    %c3 = arith.constant 3 : index
    %c0_12 = arith.constant 0 : index
    %8 = vector.load %arg9[%c3, %c0_12] : memref<8x32xf32, #tpu.memory_space<vmem>>, vector<1x32xf32>
    %c4 = arith.constant 4 : index
    %c0_13 = arith.constant 0 : index
    %9 = vector.load %arg9[%c4, %c0_13] : memref<8x32xf32, #tpu.memory_space<vmem>>, vector<1x32xf32>
    %c5 = arith.constant 5 : index
    %c0_14 = arith.constant 0 : index
    %10 = vector.load %arg9[%c5, %c0_14] : memref<8x32xf32, #tpu.memory_space<vmem>>, vector<1x32xf32>
    %c6 = arith.constant 6 : index
    %c0_15 = arith.constant 0 : index
    %11 = vector.load %arg9[%c6, %c0_15] : memref<8x32xf32, #tpu.memory_space<vmem>>, vector<1x32xf32>
    %c0_16 = arith.constant 0 : index
    %c0_17 = arith.constant 0 : index
    %12 = vector.load %arg4[%c0_16, %c0_17] : memref<32x32xf32, #tpu.memory_space<vmem>>, vector<32x32xf32>
    %cst = arith.constant dense<0.000000e+00> : vector<48x32xf32>
    %13 = tpu.matmul %3, %12, %cst {dimension_numbers = #tpu.dot_dimension_numbers<[1], [0], [0], [1], [0, 0, 1, 1], [], []>} : vector<48x32xf32>, vector<32x32xf32>, vector<48x32xf32> -> vector<48x32xf32>
    %14 = vector.broadcast %5 : vector<1x32xf32> to vector<48x32xf32>
    %15 = arith.addf %13, %14 : vector<48x32xf32>
    %16 = vector.shape_cast %15 : vector<48x32xf32> to vector<6x8x32xf32>
    %17 = vector.extract_strided_slice %4 {offsets = [0, 0, 0], sizes = [6, 8, 1], strides = [1, 1, 1]} : vector<6x8x8xf32> to vector<6x8x1xf32>
    %18 = vector.extract_strided_slice %16 {offsets = [0, 0, 0], sizes = [6, 1, 32], strides = [1, 1, 1]} : vector<6x8x32xf32> to vector<6x1x32xf32>
    %19 = vector.broadcast %17 : vector<6x8x1xf32> to vector<6x8x32xf32>
    %20 = vector.broadcast %18 : vector<6x1x32xf32> to vector<6x8x32xf32>
    %21 = arith.mulf %19, %20 : vector<6x8x32xf32>
    %22 = vector.extract_strided_slice %4 {offsets = [0, 0, 1], sizes = [6, 8, 1], strides = [1, 1, 1]} : vector<6x8x8xf32> to vector<6x8x1xf32>
    %23 = vector.extract_strided_slice %16 {offsets = [0, 1, 0], sizes = [6, 1, 32], strides = [1, 1, 1]} : vector<6x8x32xf32> to vector<6x1x32xf32>
    %24 = vector.broadcast %22 : vector<6x8x1xf32> to vector<6x8x32xf32>
    %25 = vector.broadcast %23 : vector<6x1x32xf32> to vector<6x8x32xf32>
    %26 = arith.mulf %24, %25 : vector<6x8x32xf32>
    %27 = arith.addf %21, %26 : vector<6x8x32xf32>
    %28 = vector.extract_strided_slice %4 {offsets = [0, 0, 2], sizes = [6, 8, 1], strides = [1, 1, 1]} : vector<6x8x8xf32> to vector<6x8x1xf32>
    %29 = vector.extract_strided_slice %16 {offsets = [0, 2, 0], sizes = [6, 1, 32], strides = [1, 1, 1]} : vector<6x8x32xf32> to vector<6x1x32xf32>
    %30 = vector.broadcast %28 : vector<6x8x1xf32> to vector<6x8x32xf32>
    %31 = vector.broadcast %29 : vector<6x1x32xf32> to vector<6x8x32xf32>
    %32 = arith.mulf %30, %31 : vector<6x8x32xf32>
    %33 = arith.addf %27, %32 : vector<6x8x32xf32>
    %34 = vector.extract_strided_slice %4 {offsets = [0, 0, 3], sizes = [6, 8, 1], strides = [1, 1, 1]} : vector<6x8x8xf32> to vector<6x8x1xf32>
    %35 = vector.extract_strided_slice %16 {offsets = [0, 3, 0], sizes = [6, 1, 32], strides = [1, 1, 1]} : vector<6x8x32xf32> to vector<6x1x32xf32>
    %36 = vector.broadcast %34 : vector<6x8x1xf32> to vector<6x8x32xf32>
    %37 = vector.broadcast %35 : vector<6x1x32xf32> to vector<6x8x32xf32>
    %38 = arith.mulf %36, %37 : vector<6x8x32xf32>
    %39 = arith.addf %33, %38 : vector<6x8x32xf32>
    %40 = vector.extract_strided_slice %4 {offsets = [0, 0, 4], sizes = [6, 8, 1], strides = [1, 1, 1]} : vector<6x8x8xf32> to vector<6x8x1xf32>
    %41 = vector.extract_strided_slice %16 {offsets = [0, 4, 0], sizes = [6, 1, 32], strides = [1, 1, 1]} : vector<6x8x32xf32> to vector<6x1x32xf32>
    %42 = vector.broadcast %40 : vector<6x8x1xf32> to vector<6x8x32xf32>
    %43 = vector.broadcast %41 : vector<6x1x32xf32> to vector<6x8x32xf32>
    %44 = arith.mulf %42, %43 : vector<6x8x32xf32>
    %45 = arith.addf %39, %44 : vector<6x8x32xf32>
    %46 = vector.extract_strided_slice %4 {offsets = [0, 0, 5], sizes = [6, 8, 1], strides = [1, 1, 1]} : vector<6x8x8xf32> to vector<6x8x1xf32>
    %47 = vector.extract_strided_slice %16 {offsets = [0, 5, 0], sizes = [6, 1, 32], strides = [1, 1, 1]} : vector<6x8x32xf32> to vector<6x1x32xf32>
    %48 = vector.broadcast %46 : vector<6x8x1xf32> to vector<6x8x32xf32>
    %49 = vector.broadcast %47 : vector<6x1x32xf32> to vector<6x8x32xf32>
    %50 = arith.mulf %48, %49 : vector<6x8x32xf32>
    %51 = arith.addf %45, %50 : vector<6x8x32xf32>
    %52 = vector.extract_strided_slice %4 {offsets = [0, 0, 6], sizes = [6, 8, 1], strides = [1, 1, 1]} : vector<6x8x8xf32> to vector<6x8x1xf32>
    %53 = vector.extract_strided_slice %16 {offsets = [0, 6, 0], sizes = [6, 1, 32], strides = [1, 1, 1]} : vector<6x8x32xf32> to vector<6x1x32xf32>
    %54 = vector.broadcast %52 : vector<6x8x1xf32> to vector<6x8x32xf32>
    %55 = vector.broadcast %53 : vector<6x1x32xf32> to vector<6x8x32xf32>
    %56 = arith.mulf %54, %55 : vector<6x8x32xf32>
    %57 = arith.addf %51, %56 : vector<6x8x32xf32>
    %58 = vector.extract_strided_slice %4 {offsets = [0, 0, 7], sizes = [6, 8, 1], strides = [1, 1, 1]} : vector<6x8x8xf32> to vector<6x8x1xf32>
    %59 = vector.extract_strided_slice %16 {offsets = [0, 7, 0], sizes = [6, 1, 32], strides = [1, 1, 1]} : vector<6x8x32xf32> to vector<6x1x32xf32>
    %60 = vector.broadcast %58 : vector<6x8x1xf32> to vector<6x8x32xf32>
    %61 = vector.broadcast %59 : vector<6x1x32xf32> to vector<6x8x32xf32>
    %62 = arith.mulf %60, %61 : vector<6x8x32xf32>
    %63 = arith.addf %57, %62 : vector<6x8x32xf32>
    %64 = vector.shape_cast %63 : vector<6x8x32xf32> to vector<48x32xf32>
    %c0_18 = arith.constant 0 : index
    %c0_19 = arith.constant 0 : index
    %65 = vector.load %arg5[%c0_18, %c0_19] : memref<32x32xf32, #tpu.memory_space<vmem>>, vector<32x32xf32>
    %cst_20 = arith.constant dense<0.000000e+00> : vector<48x32xf32>
    %66 = tpu.matmul %64, %65, %cst_20 {dimension_numbers = #tpu.dot_dimension_numbers<[1], [0], [0], [1], [0, 0, 1, 1], [], []>} : vector<48x32xf32>, vector<32x32xf32>, vector<48x32xf32> -> vector<48x32xf32>
    %67 = vector.broadcast %6 : vector<1x32xf32> to vector<48x32xf32>
    %68 = arith.addf %66, %67 : vector<48x32xf32>
    %69 = arith.addf %1, %68 : vector<48x32xf32>
    %cst_21 = arith.constant dense<0.000000e+00> : vector<48xf32>
    %70 = vector.multi_reduction <add>, %69, %cst_21 [1] : vector<48x32xf32> to vector<48xf32>
    %71 = vector.shape_cast %70 : vector<48xf32> to vector<48x1xf32>
    %cst_22 = arith.constant 3.200000e+01 : f32
    %72 = vector.broadcast %cst_22 : f32 to vector<48x1xf32>
    %73 = arith.divf %71, %72 : vector<48x1xf32>
    %74 = vector.broadcast %73 : vector<48x1xf32> to vector<48x32xf32>
    %75 = arith.subf %69, %74 : vector<48x32xf32>
    %76 = arith.mulf %75, %75 : vector<48x32xf32>
    %cst_23 = arith.constant dense<0.000000e+00> : vector<48xf32>
    %77 = vector.multi_reduction <add>, %76, %cst_23 [1] : vector<48x32xf32> to vector<48xf32>
    %78 = vector.shape_cast %77 : vector<48xf32> to vector<48x1xf32>
    %cst_24 = arith.constant 3.200000e+01 : f32
    %79 = vector.broadcast %cst_24 : f32 to vector<48x1xf32>
    %80 = arith.divf %78, %79 : vector<48x1xf32>
    %cst_25 = arith.constant 9.99999974E-6 : f32
    %81 = vector.broadcast %cst_25 : f32 to vector<48x1xf32>
    %82 = arith.addf %80, %81 : vector<48x1xf32>
    %83 = math.rsqrt %82 : vector<48x1xf32>
    %84 = vector.broadcast %83 : vector<48x1xf32> to vector<48x32xf32>
    %85 = arith.mulf %75, %84 : vector<48x32xf32>
    %86 = vector.broadcast %8 : vector<1x32xf32> to vector<48x32xf32>
    %87 = arith.mulf %85, %86 : vector<48x32xf32>
    %88 = vector.broadcast %9 : vector<1x32xf32> to vector<48x32xf32>
    %89 = arith.addf %87, %88 : vector<48x32xf32>
    %c0_26 = arith.constant 0 : index
    %c0_27 = arith.constant 0 : index
    %90 = vector.load %arg6[%c0_26, %c0_27] : memref<32x64xf32, #tpu.memory_space<vmem>>, vector<32x64xf32>
    %cst_28 = arith.constant dense<0.000000e+00> : vector<48x64xf32>
    %91 = tpu.matmul %89, %90, %cst_28 {dimension_numbers = #tpu.dot_dimension_numbers<[1], [0], [0], [1], [0, 0, 1, 1], [], []>} : vector<48x32xf32>, vector<32x64xf32>, vector<48x64xf32> -> vector<48x64xf32>
    %c0_29 = arith.constant 0 : index
    %c0_30 = arith.constant 0 : index
    %92 = vector.load %arg8[%c0_29, %c0_30] : memref<1x64xf32, #tpu.memory_space<vmem>>, vector<1x64xf32>
    %93 = vector.broadcast %92 : vector<1x64xf32> to vector<48x64xf32>
    %94 = arith.addf %91, %93 : vector<48x64xf32>
    %cst_31 = arith.constant 0.000000e+00 : f32
    %95 = vector.broadcast %cst_31 : f32 to vector<48x64xf32>
    %96 = arith.maximumf %94, %95 : vector<48x64xf32>
    %c0_32 = arith.constant 0 : index
    %c0_33 = arith.constant 0 : index
    %97 = vector.load %arg7[%c0_32, %c0_33] : memref<64x32xf32, #tpu.memory_space<vmem>>, vector<64x32xf32>
    %cst_34 = arith.constant dense<0.000000e+00> : vector<48x32xf32>
    %98 = tpu.matmul %96, %97, %cst_34 {dimension_numbers = #tpu.dot_dimension_numbers<[1], [0], [0], [1], [0, 0, 1, 1], [], []>} : vector<48x64xf32>, vector<64x32xf32>, vector<48x32xf32> -> vector<48x32xf32>
    %99 = vector.broadcast %7 : vector<1x32xf32> to vector<48x32xf32>
    %100 = arith.addf %98, %99 : vector<48x32xf32>
    %101 = arith.addf %89, %100 : vector<48x32xf32>
    %cst_35 = arith.constant dense<0.000000e+00> : vector<48xf32>
    %102 = vector.multi_reduction <add>, %101, %cst_35 [1] : vector<48x32xf32> to vector<48xf32>
    %103 = vector.shape_cast %102 : vector<48xf32> to vector<48x1xf32>
    %cst_36 = arith.constant 3.200000e+01 : f32
    %104 = vector.broadcast %cst_36 : f32 to vector<48x1xf32>
    %105 = arith.divf %103, %104 : vector<48x1xf32>
    %106 = vector.broadcast %105 : vector<48x1xf32> to vector<48x32xf32>
    %107 = arith.subf %101, %106 : vector<48x32xf32>
    %108 = arith.mulf %107, %107 : vector<48x32xf32>
    %cst_37 = arith.constant dense<0.000000e+00> : vector<48xf32>
    %109 = vector.multi_reduction <add>, %108, %cst_37 [1] : vector<48x32xf32> to vector<48xf32>
    %110 = vector.shape_cast %109 : vector<48xf32> to vector<48x1xf32>
    %cst_38 = arith.constant 3.200000e+01 : f32
    %111 = vector.broadcast %cst_38 : f32 to vector<48x1xf32>
    %112 = arith.divf %110, %111 : vector<48x1xf32>
    %cst_39 = arith.constant 9.99999974E-6 : f32
    %113 = vector.broadcast %cst_39 : f32 to vector<48x1xf32>
    %114 = arith.addf %112, %113 : vector<48x1xf32>
    %115 = math.rsqrt %114 : vector<48x1xf32>
    %116 = vector.broadcast %115 : vector<48x1xf32> to vector<48x32xf32>
    %117 = arith.mulf %107, %116 : vector<48x32xf32>
    %118 = vector.broadcast %10 : vector<1x32xf32> to vector<48x32xf32>
    %119 = arith.mulf %117, %118 : vector<48x32xf32>
    %120 = vector.broadcast %11 : vector<1x32xf32> to vector<48x32xf32>
    %121 = arith.addf %119, %120 : vector<48x32xf32>
    %122 = vector.shape_cast %121 : vector<48x32xf32> to vector<6x8x32xf32>
    %c0_40 = arith.constant 0 : index
    %c0_41 = arith.constant 0 : index
    %c0_42 = arith.constant 0 : index
    %123 = vector.load %arg10[%c0_40, %c0_41, %c0_42] : memref<6x8x32xf32, #tpu.memory_space<vmem>>, vector<6x8x32xf32>
    tpu.vector_store %arg10[%c0_40, %c0_41, %c0_42], %122 {strides = array<i32>} : memref<6x8x32xf32, #tpu.memory_space<vmem>>, vector<6x8x32xf32>,
    return
  }
  func.func @transform_0(%arg0: i32) -> (i32, i32, i32) {
    %c0_i32 = arith.constant 0 : i32
    %c0_i32_0 = arith.constant 0 : i32
    %c0_i32_1 = arith.constant 0 : i32
    return %arg0, %c0_i32, %c0_i32_0 : i32, i32, i32
  }
  func.func @transform_1(%arg0: i32) -> (i32, i32, i32) {
    %c0_i32 = arith.constant 0 : i32
    %c0_i32_0 = arith.constant 0 : i32
    %c0_i32_1 = arith.constant 0 : i32
    return %arg0, %c0_i32, %c0_i32_0 : i32, i32, i32
  }
  func.func @transform_2(%arg0: i32) -> (i32, i32, i32) {
    %c0_i32 = arith.constant 0 : i32
    %c0_i32_0 = arith.constant 0 : i32
    %c0_i32_1 = arith.constant 0 : i32
    return %arg0, %c0_i32, %c0_i32_0 : i32, i32, i32
  }
  func.func @transform_3(%arg0: i32) -> (i32, i32) {
    %c0_i32 = arith.constant 0 : i32
    %c0_i32_0 = arith.constant 0 : i32
    %c0_i32_1 = arith.constant 0 : i32
    return %c0_i32, %c0_i32_0 : i32, i32
  }
  func.func @transform_4(%arg0: i32) -> (i32, i32) {
    %c0_i32 = arith.constant 0 : i32
    %c0_i32_0 = arith.constant 0 : i32
    %c0_i32_1 = arith.constant 0 : i32
    return %c0_i32, %c0_i32_0 : i32, i32
  }
  func.func @transform_5(%arg0: i32) -> (i32, i32) {
    %c0_i32 = arith.constant 0 : i32
    %c0_i32_0 = arith.constant 0 : i32
    %c0_i32_1 = arith.constant 0 : i32
    return %c0_i32, %c0_i32_0 : i32, i32
  }
  func.func @transform_6(%arg0: i32) -> (i32, i32) {
    %c0_i32 = arith.constant 0 : i32
    %c0_i32_0 = arith.constant 0 : i32
    %c0_i32_1 = arith.constant 0 : i32
    return %c0_i32, %c0_i32_0 : i32, i32
  }
  func.func @transform_7(%arg0: i32) -> (i32, i32) {
    %c0_i32 = arith.constant 0 : i32
    %c0_i32_0 = arith.constant 0 : i32
    %c0_i32_1 = arith.constant 0 : i32
    return %c0_i32, %c0_i32_0 : i32, i32
  }
  func.func @transform_8(%arg0: i32) -> (i32, i32) {
    %c0_i32 = arith.constant 0 : i32
    %c0_i32_0 = arith.constant 0 : i32
    %c0_i32_1 = arith.constant 0 : i32
    return %c0_i32, %c0_i32_0 : i32, i32
  }
  func.func @transform_9(%arg0: i32) -> (i32, i32, i32) {
    %c0_i32 = arith.constant 0 : i32
    %c0_i32_0 = arith.constant 0 : i32
    %c0_i32_1 = arith.constant 0 : i32
    return %arg0, %c0_i32, %c0_i32_0 : i32, i32, i32
  }
}

</mosaic_0001>

<llo_original>
// kernel: tpu_custom_call.1
$region0: #{tpu_custom_call.1}
  #allocation0 [shape = 'u32[]', space=smem, size = 0x4, offset = 0x4, fixed_abs, tag = 'smem constant byte address 0x4 - core index']
  #allocation1 [shape = 'u32[144,128]{1,0:T(1,128)}', space=vmem, size = 0x12000, scoped, tag = 'internal scratch']
  %s0 = inlined_call_operand.vmem [shape: f32[6,8,32], index: 0, kind: input, shape index: {}]
  %s1 = inlined_call_operand.vmem [shape: f32[6,8,32], index: 1, kind: input, shape index: {}]
  %s2 = inlined_call_operand.hbm [shape: f32[6,8,8], index: 2, kind: input, shape index: {}]
  %s3 = inlined_call_operand.hbm [shape: f32[32,32], index: 3, kind: input, shape index: {}]
  %s4 = inlined_call_operand.hbm [shape: f32[32,32], index: 4, kind: input, shape index: {}]
  %s5 = inlined_call_operand.hbm [shape: f32[32,64], index: 5, kind: input, shape index: {}]
  %s6 = inlined_call_operand.vmem [shape: f32[64,32], index: 6, kind: input, shape index: {}]
  %s7 = inlined_call_operand.vmem [shape: f32[1,64], index: 7, kind: input, shape index: {}]
  %s8 = inlined_call_operand.vmem [shape: f32[8,32], index: 8, kind: input, shape index: {}]
  %s9 = inlined_call_operand.hbm [shape: f32[6,8,32], index: 9, kind: output, shape index: {}]
  %s10 = sld [smem:[#allocation0]]
  $region62: #{tpu_custom_call.1} parent=0
    _
  %s12 = ssub.s32 1, %s10
  %s13 = scalar_select 0, %s12, %s10
  $region1: #{tpu_custom_call.1} parent=0
    #allocation2 [shape = 'u8[24576]{0}', space=vmem, size = 0x6000, scoped, tag = 'input window, operand 2, single buffered']
    #allocation3 [shape = 's32[1]{0}', space=sflag, size = 0x4, scoped, tag = 'scoped memory for tpu_custom_call.1']
    #allocation4 [shape = 's32[1]{0}', space=sflag, size = 0x4, scoped, tag = 'scoped memory for tpu_custom_call.1']
    #allocation5 [shape = 'u8[16384]{0}', space=vmem, size = 0x4000, scoped, tag = 'input window, operand 3, single buffered']
    #allocation6 [shape = 's32[1]{0}', space=sflag, size = 0x4, scoped, tag = 'scoped memory for tpu_custom_call.1']
    #allocation7 [shape = 'u8[16384]{0}', space=vmem, size = 0x4000, scoped, tag = 'input window, operand 4, single buffered']
    #allocation8 [shape = 'u8[16384]{0}', space=vmem, size = 0x4000, scoped, tag = 'input window, operand 5, single buffered']
    #allocation9 [shape = 's32[1]{0}', space=sflag, size = 0x4, scoped, tag = 'scoped memory for tpu_custom_call.1']
    #allocation10 [shape = 'u8[24576]{0}', space=vmem, size = 0x6000, scoped, tag = 'output window, operand 0, single buffered']
    %14 = vsyncpa [#allocation3], 0
    %15 = vsyncpa [#allocation6], 0
    %16 = vsyncpa [#allocation9], 0
    %17 = vsyncpa [#allocation4], 0
    // Predicated region
    $region2: #{tpu_custom_call.1} parent=1 // pred_check
      _
    $region3: #{tpu_custom_call.1} parent=1 // pred_check_branch
      %19 = sbr.rel (0) target = $region5
    $region4: #{tpu_custom_call.1} parent=1 // pred_region
      _
    $region5: #{tpu_custom_call.1} parent=1 // pred_fallthru
      _
    // Predicated region
    $region6: #{tpu_custom_call.1} parent=1 // pred_check
      _
    $region7: #{tpu_custom_call.1} parent=1 // pred_check_branch
      %21 = sbr.rel (0) target = $region9
    $region8: #{tpu_custom_call.1} parent=1 // pred_region
      _
    $region9: #{tpu_custom_call.1} parent=1 // pred_fallthru
      _
    // Predicated region
    $region10: #{tpu_custom_call.1} parent=1 // pred_check
      _
    $region11: #{tpu_custom_call.1} parent=1 // pred_check_branch
      %23 = sbr.rel (0) target = $region13
    $region12: #{tpu_custom_call.1} parent=1 // pred_region
      %s25 = ssub.s32 768, 768
      %26 = vsyncadd [#allocation3], %s25
      %s27 = sshll.u32 [#allocation2], 4
      %s28 = int_to_ptr.vmem [resolvable:$true] %s27
      %33 = dma.hbm_to_vmem [thread:$0]  %s2, 768, %s28, [#allocation3], 128, 128, 8
    $region13: #{tpu_custom_call.1} parent=1 // pred_fallthru
      _
    // Predicated region
    $region14: #{tpu_custom_call.1} parent=1 // pred_check
      _
    $region15: #{tpu_custom_call.1} parent=1 // pred_check_branch
      %35 = sbr.rel (0) target = $region17
    $region16: #{tpu_custom_call.1} parent=1 // pred_region
      %s37 = ssub.s32 512, 512
      %38 = vsyncadd [#allocation6], %s37
      %s39 = sshll.u32 [#allocation5], 4
      %s40 = int_to_ptr.vmem [resolvable:$true] %s39
      %45 = dma.hbm_to_vmem [thread:$0]  %s3, 512, %s40, [#allocation6], 128, 128, 8
    $region17: #{tpu_custom_call.1} parent=1 // pred_fallthru
      _
    // Predicated region
    $region18: #{tpu_custom_call.1} parent=1 // pred_check
      _
    $region19: #{tpu_custom_call.1} parent=1 // pred_check_branch
      %47 = sbr.rel (0) target = $region21
    $region20: #{tpu_custom_call.1} parent=1 // pred_region
      %s49 = ssub.s32 512, 512
      %50 = vsyncadd [#allocation6], %s49
      %s51 = sshll.u32 [#allocation7], 4
      %s52 = int_to_ptr.vmem [resolvable:$true] %s51
      %57 = dma.hbm_to_vmem [thread:$0]  %s4, 512, %s52, [#allocation6], 128, 128, 8
    $region21: #{tpu_custom_call.1} parent=1 // pred_fallthru
      _
    // Predicated region
    $region22: #{tpu_custom_call.1} parent=1 // pred_check
      _
    $region23: #{tpu_custom_call.1} parent=1 // pred_check_branch
      %59 = sbr.rel (0) target = $region25
    $region24: #{tpu_custom_call.1} parent=1 // pred_region
      %s61 = ssub.s32 512, 512
      %62 = vsyncadd [#allocation9], %s61
      %s63 = sshll.u32 [#allocation8], 4
      %s64 = int_to_ptr.vmem [resolvable:$true] %s63
      %69 = dma.hbm_to_vmem [thread:$0]  %s5, 512, %s64, [#allocation9], 128, 128, 8
    $region25: #{tpu_custom_call.1} parent=1 // pred_fallthru
      _
    // Predicated region
    $region26: #{tpu_custom_call.1} parent=1 // pred_check
      _
    $region27: #{tpu_custom_call.1} parent=1 // pred_check_branch
      %71 = sbr.rel (0) target = $region29
    $region28: #{tpu_custom_call.1} parent=1 // pred_region
      _
    $region29: #{tpu_custom_call.1} parent=1 // pred_fallthru
      _
    // Predicated region
    $region30: #{tpu_custom_call.1} parent=1 // pred_check
      _
    $region31: #{tpu_custom_call.1} parent=1 // pred_check_branch
      %73 = sbr.rel (0) target = $region33
    $region32: #{tpu_custom_call.1} parent=1 // pred_region
      _
    $region33: #{tpu_custom_call.1} parent=1 // pred_fallthru
      _
    // Predicated region
    $region34: #{tpu_custom_call.1} parent=1 // pred_check
      _
    $region35: #{tpu_custom_call.1} parent=1 // pred_check_branch
      %75 = sbr.rel (0) target = $region37
    $region36: #{tpu_custom_call.1} parent=1 // pred_region
      _
    $region37: #{tpu_custom_call.1} parent=1 // pred_fallthru
      _
    // Predicated region
    $region38: #{tpu_custom_call.1} parent=1 // pred_check
      _
    $region39: #{tpu_custom_call.1} parent=1 // pred_check_branch
      %77 = sbr.rel (0) target = $region41
    $region40: #{tpu_custom_call.1} parent=1 // pred_region
      %78 = dma.done [#allocation3], 768
    $region41: #{tpu_custom_call.1} parent=1 // pred_fallthru
      _
    // Predicated region
    $region42: #{tpu_custom_call.1} parent=1 // pred_check
      _
    $region43: #{tpu_custom_call.1} parent=1 // pred_check_branch
      %80 = sbr.rel (0) target = $region45
    $region44: #{tpu_custom_call.1} parent=1 // pred_region
      %81 = dma.done [#allocation6], 512
    $region45: #{tpu_custom_call.1} parent=1 // pred_fallthru
      _
    // Predicated region
    $region46: #{tpu_custom_call.1} parent=1 // pred_check
      _
    $region47: #{tpu_custom_call.1} parent=1 // pred_check_branch
      %83 = sbr.rel (0) target = $region49
    $region48: #{tpu_custom_call.1} parent=1 // pred_region
      %84 = dma.done [#allocation6], 512
    $region49: #{tpu_custom_call.1} parent=1 // pred_fallthru
      _
    // Predicated region
    $region50: #{tpu_custom_call.1} parent=1 // pred_check
      _
    $region51: #{tpu_custom_call.1} parent=1 // pred_check_branch
      %86 = sbr.rel (0) target = $region53
    $region52: #{tpu_custom_call.1} parent=1 // pred_region
      %87 = dma.done [#allocation9], 512
    $region53: #{tpu_custom_call.1} parent=1 // pred_fallthru
      _
    %v88 = vld [vmem:[%s0] sm:$0xff]
    %v89 = vld [vmem:[%s0 + $0x8] sm:$0xff]
    %v90 = vld [vmem:[%s0 + $0x10] sm:$0xff]
    %v91 = vld [vmem:[%s0 + $0x18] sm:$0xff]
    %v92 = vld [vmem:[%s0 + $0x20] sm:$0xff]
    %v93 = vld [vmem:[%s0 + $0x28] sm:$0xff]
    %v94 = vld [vmem:[%s1] sm:$0xff]
    %v95 = vld [vmem:[%s1 + $0x8] sm:$0xff]
    %v96 = vld [vmem:[%s1 + $0x10] sm:$0xff]
    %v97 = vld [vmem:[%s1 + $0x18] sm:$0xff]
    %v98 = vld [vmem:[%s1 + $0x20] sm:$0xff]
    %v99 = vld [vmem:[%s1 + $0x28] sm:$0xff]
    %v100 = vld [vmem:[#allocation2] sm:$0xff]
    %v101 = vld [vmem:[#allocation2 + $0x8] sm:$0xff]
    %v102 = vld [vmem:[#allocation2 + $0x10] sm:$0xff]
    %v103 = vld [vmem:[#allocation2 + $0x18] sm:$0xff]
    %v104 = vld [vmem:[#allocation2 + $0x20] sm:$0xff]
    %v105 = vld [vmem:[#allocation2 + $0x28] sm:$0xff]
    %v106 = vld [vmem:[%s8] sm:$0x1]
    %v107 = vld [vmem:[%s8 + $0x1] sm:$0x1]
    %v108 = vld [vmem:[%s8 + $0x2] sm:$0x1]
    %v109 = vld [vmem:[%s8 + $0x3] sm:$0x1]
    %v110 = vld [vmem:[%s8 + $0x4] sm:$0x1]
    %v111 = vld [vmem:[%s8 + $0x5] sm:$0x1]
    %v112 = vld [vmem:[%s8 + $0x6] sm:$0x1]
    %v113 = vld [vmem:[#allocation5] sm:$0xff]
    %v114 = vld [vmem:[#allocation5 + $0x8] sm:$0xff]
    %v115 = vld [vmem:[#allocation5 + $0x10] sm:$0xff]
    %v116 = vld [vmem:[#allocation5 + $0x18] sm:$0xff]
    %v117 = vlaneseq
    %v118 = vshrl.u32 %v117, 7
    %v119 = vsub.s32 0, %v118
    %v120 = vrot.slane %v106, %v119
    %vm121 = vcmask 261120
    %v123 = vsel %vm121, %v94, 0
    %v126 = vsel %vm121, %v95, 0
    %v129 = vsel %vm121, %v96, 0
    %v132 = vsel %vm121, %v97, 0
    %v135 = vsel %vm121, %v98, 0
    %v138 = vsel %vm121, %v99, 0
    %140 = vmatprep.subr.mxu0 0.0
    %141 = vmatpush1.msra.mxu0 0.0
    %142 = vmatprep.subr.mxu0 0.0
    %143 = vmatpush1.msra.mxu0 0.0
    %144 = vmatprep.subr.mxu0 0.0
    %145 = vmatpush1.msra.mxu0 0.0
    %146 = vmatprep.subr.mxu0 0.0
    %147 = vmatpush1.msra.mxu0 0.0
    %148 = vmatprep.subr.mxu0 0.0
    %149 = vmatpush1.msra.mxu0 0.0
    %150 = vmatprep.subr.mxu0 0.0
    %151 = vmatpush1.msra.mxu0 0.0
    %152 = vmatprep.subr.mxu0 0.0
    %153 = vmatpush1.msra.mxu0 0.0
    %154 = vmatprep.subr.mxu0 0.0
    %155 = vmatpush1.msra.mxu0 0.0
    %156 = vmatprep.subr.mxu0 0.0
    %157 = vmatpush1.msra.mxu0 0.0
    %158 = vmatprep.subr.mxu0 0.0
    %159 = vmatpush1.msra.mxu0 0.0
    %160 = vmatprep.subr.mxu0 0.0
    %161 = vmatpush1.msra.mxu0 0.0
    %162 = vmatprep.subr.mxu0 0.0
    %163 = vmatpush1.msra.mxu0 0.0
    %164 = vmatprep.subr.mxu0 0.0
    %165 = vmatpush1.msra.mxu0 %v116
    %166 = vmatprep.subr.mxu0 0.0
    %167 = vmatpush1.msra.mxu0 %v115
    %168 = vmatprep.subr.mxu0 0.0
    %169 = vmatpush1.msra.mxu0 %v114
    %170 = vmatprep.subr.mxu0 0.0
    %171 = vmatpush1.msra.mxu0 %v113
    %172 = vmatprep.subr.mxu0 0.0
    %173 = vmatpush2.msra.mxu0 0.0
    %174 = vmatprep.subr.mxu0 0.0
    %175 = vmatpush2.msra.mxu0 0.0
    %176 = vmatprep.subr.mxu0 0.0
    %177 = vmatpush2.msra.mxu0 0.0
    %178 = vmatprep.subr.mxu0 0.0
    %179 = vmatpush2.msra.mxu0 0.0
    %180 = vmatprep.subr.mxu0 0.0
    %181 = vmatpush2.msra.mxu0 0.0
    %182 = vmatprep.subr.mxu0 0.0
    %183 = vmatpush2.msra.mxu0 0.0
    %184 = vmatprep.subr.mxu0 0.0
    %185 = vmatpush2.msra.mxu0 0.0
    %186 = vmatprep.subr.mxu0 0.0
    %187 = vmatpush2.msra.mxu0 0.0
    %188 = vmatprep.subr.mxu0 0.0
    %189 = vmatpush2.msra.mxu0 0.0
    %190 = vmatprep.subr.mxu0 0.0
    %191 = vmatpush2.msra.mxu0 0.0
    %192 = vmatprep.subr.mxu0 0.0
    %193 = vmatpush2.msra.mxu0 0.0
    %194 = vmatprep.subr.mxu0 0.0
    %195 = vmatpush2.msra.mxu0 0.0
    %196 = vmatprep.subr.mxu0 0.0
    %197 = vmatpush2.msra.mxu0 0.0
    %198 = vmatprep.subr.mxu0 0.0
    %199 = vmatpush2.msra.mxu0 0.0
    %200 = vmatprep.subr.mxu0 0.0
    %201 = vmatpush2.msra.mxu0 0.0
    %202 = vmatprep.subr.mxu0 0.0
    %203 = vmatpush2.msra.mxu0 0.0
    %204 = vmatprep.mubr.f32.mxu0 0.0
    %205 = vmatmul.mubr.f32.gmra.mxu0 %v123
    %v206 = vpop.f32.mrf.mxu0
    %v207 = vadd.f32 %v120, %v206
    %v208 = vpop.f32.mrf.mxu0
    %209 = vmatprep.mubr.f32.mxu0 0.0
    %210 = vmatmul.mubr.f32.gmra.mxu0 %v126
    %v211 = vpop.f32.mrf.mxu0
    %v212 = vadd.f32 %v120, %v211
    %v213 = vpop.f32.mrf.mxu0
    %214 = vmatprep.mubr.f32.mxu0 0.0
    %215 = vmatmul.mubr.f32.gmra.mxu0 %v129
    %v216 = vpop.f32.mrf.mxu0
    %v217 = vadd.f32 %v120, %v216
    %v218 = vpop.f32.mrf.mxu0
    %219 = vmatprep.mubr.f32.mxu0 0.0
    %220 = vmatmul.mubr.f32.gmra.mxu0 %v132
    %v221 = vpop.f32.mrf.mxu0
    %v222 = vadd.f32 %v120, %v221
    %v223 = vpop.f32.mrf.mxu0
    %224 = vmatprep.mubr.f32.mxu0 0.0
    %225 = vmatmul.mubr.f32.gmra.mxu0 %v135
    %v226 = vpop.f32.mrf.mxu0
    %v227 = vadd.f32 %v120, %v226
    %v228 = vpop.f32.mrf.mxu0
    %229 = vmatprep.mubr.f32.mxu0 0.0
    %230 = vmatmul.mubr.f32.gmra.mxu0 %v138
    %v231 = vpop.f32.mrf.mxu0
    %v232 = vadd.f32 %v120, %v231
    %v233 = vpop.f32.mrf.mxu0
    %234 = vdwg.mxu0
    %236 = vset.pattern.permute.xlu0 0
    %237 = vperm.xlu0 %236, %v100
    %v238 = vpop.permute.xlu0 %237
    %241 = vset.pattern.permute.xlu0 0
    %242 = vperm.xlu0 %241, %v101
    %v243 = vpop.permute.xlu0 %242
    %246 = vset.pattern.permute.xlu0 0
    %247 = vperm.xlu0 %246, %v102
    %v248 = vpop.permute.xlu0 %247
    %251 = vset.pattern.permute.xlu0 0
    %252 = vperm.xlu0 %251, %v103
    %v253 = vpop.permute.xlu0 %252
    %256 = vset.pattern.permute.xlu0 0
    %257 = vperm.xlu0 %256, %v104
    %v258 = vpop.permute.xlu0 %257
    %261 = vset.pattern.permute.xlu0 0
    %262 = vperm.xlu0 %261, %v105
    %v263 = vpop.permute.xlu0 %262
    %v265 = vlaneseq
    %v266 = vshrl.u32 %v265, 7
    %v267 = vsub.s32 0, %v266
    %v268 = vrot.slane %v207, %v267
    %v269 = vlaneseq
    %v270 = vshrl.u32 %v269, 7
    %v271 = vsub.s32 0, %v270
    %v272 = vrot.slane %v212, %v271
    %v273 = vlaneseq
    %v274 = vshrl.u32 %v273, 7
    %v275 = vsub.s32 0, %v274
    %v276 = vrot.slane %v217, %v275
    %v277 = vlaneseq
    %v278 = vshrl.u32 %v277, 7
    %v279 = vsub.s32 0, %v278
    %v280 = vrot.slane %v222, %v279
    %v281 = vlaneseq
    %v282 = vshrl.u32 %v281, 7
    %v283 = vsub.s32 0, %v282
    %v284 = vrot.slane %v227, %v283
    %v285 = vlaneseq
    %v286 = vshrl.u32 %v285, 7
    %v287 = vsub.s32 0, %v286
    %v288 = vrot.slane %v232, %v287
    %v289 = vmul.f32 %v238, %v268
    %v290 = vmul.f32 %v243, %v272
    %v291 = vmul.f32 %v248, %v276
    %v292 = vmul.f32 %v253, %v280
    %v293 = vmul.f32 %v258, %v284
    %v294 = vmul.f32 %v263, %v288
    %295 = vset.pattern.permute.xlu0 1
    %296 = vperm.xlu0 %295, %v100
    %v297 = vpop.permute.xlu0 %296
    %299 = vset.pattern.permute.xlu0 1
    %300 = vperm.xlu0 %299, %v101
    %v301 = vpop.permute.xlu0 %300
    %303 = vset.pattern.permute.xlu0 1
    %304 = vperm.xlu0 %303, %v102
    %v305 = vpop.permute.xlu0 %304
    %307 = vset.pattern.permute.xlu0 1
    %308 = vperm.xlu0 %307, %v103
    %v309 = vpop.permute.xlu0 %308
    %311 = vset.pattern.permute.xlu0 1
    %312 = vperm.xlu0 %311, %v104
    %v313 = vpop.permute.xlu0 %312
    %315 = vset.pattern.permute.xlu0 1
    %316 = vperm.xlu0 %315, %v105
    %v317 = vpop.permute.xlu0 %316
    %v319 = vlaneseq
    %v320 = vshrl.u32 %v319, 7
    %v321 = vsub.s32 1, %v320
    %v322 = vrot.slane %v207, %v321
    %v323 = vlaneseq
    %v324 = vshrl.u32 %v323, 7
    %v325 = vsub.s32 1, %v324
    %v326 = vrot.slane %v212, %v325
    %v327 = vlaneseq
    %v328 = vshrl.u32 %v327, 7
    %v329 = vsub.s32 1, %v328
    %v330 = vrot.slane %v217, %v329
    %v331 = vlaneseq
    %v332 = vshrl.u32 %v331, 7
    %v333 = vsub.s32 1, %v332
    %v334 = vrot.slane %v222, %v333
    %v335 = vlaneseq
    %v336 = vshrl.u32 %v335, 7
    %v337 = vsub.s32 1, %v336
    %v338 = vrot.slane %v227, %v337
    %v339 = vlaneseq
    %v340 = vshrl.u32 %v339, 7
    %v341 = vsub.s32 1, %v340
    %v342 = vrot.slane %v232, %v341
    %v343 = vmul.f32 %v297, %v322
    %v344 = vmul.f32 %v301, %v326
    %v345 = vmul.f32 %v305, %v330
    %v346 = vmul.f32 %v309, %v334
    %v347 = vmul.f32 %v313, %v338
    %v348 = vmul.f32 %v317, %v342
    %v349 = vadd.f32 %v289, %v343
    %v350 = vadd.f32 %v290, %v344
    %v351 = vadd.f32 %v291, %v345
    %v352 = vadd.f32 %v292, %v346
    %v353 = vadd.f32 %v293, %v347
    %v354 = vadd.f32 %v294, %v348
    %355 = vset.pattern.permute.xlu0 2
    %356 = vperm.xlu0 %355, %v100
    %v357 = vpop.permute.xlu0 %356
    %359 = vset.pattern.permute.xlu0 2
    %360 = vperm.xlu0 %359, %v101
    %v361 = vpop.permute.xlu0 %360
    %363 = vset.pattern.permute.xlu0 2
    %364 = vperm.xlu0 %363, %v102
    %v365 = vpop.permute.xlu0 %364
    %367 = vset.pattern.permute.xlu0 2
    %368 = vperm.xlu0 %367, %v103
    %v369 = vpop.permute.xlu0 %368
    %371 = vset.pattern.permute.xlu0 2
    %372 = vperm.xlu0 %371, %v104
    %v373 = vpop.permute.xlu0 %372
    %375 = vset.pattern.permute.xlu0 2
    %376 = vperm.xlu0 %375, %v105
    %v377 = vpop.permute.xlu0 %376
    %v379 = vlaneseq
    %v380 = vshrl.u32 %v379, 7
    %v381 = vsub.s32 2, %v380
    %v382 = vrot.slane %v207, %v381
    %v383 = vlaneseq
    %v384 = vshrl.u32 %v383, 7
    %v385 = vsub.s32 2, %v384
    %v386 = vrot.slane %v212, %v385
    %v387 = vlaneseq
    %v388 = vshrl.u32 %v387, 7
    %v389 = vsub.s32 2, %v388
    %v390 = vrot.slane %v217, %v389
    %v391 = vlaneseq
    %v392 = vshrl.u32 %v391, 7
    %v393 = vsub.s32 2, %v392
    %v394 = vrot.slane %v222, %v393
    %v395 = vlaneseq
    %v396 = vshrl.u32 %v395, 7
    %v397 = vsub.s32 2, %v396
    %v398 = vrot.slane %v227, %v397
    %v399 = vlaneseq
    %v400 = vshrl.u32 %v399, 7
    %v401 = vsub.s32 2, %v400
    %v402 = vrot.slane %v232, %v401
    %v403 = vmul.f32 %v357, %v382
    %v404 = vmul.f32 %v361, %v386
    %v405 = vmul.f32 %v365, %v390
    %v406 = vmul.f32 %v369, %v394
    %v407 = vmul.f32 %v373, %v398
    %v408 = vmul.f32 %v377, %v402
    %v409 = vadd.f32 %v349, %v403
    %v410 = vadd.f32 %v350, %v404
    %v411 = vadd.f32 %v351, %v405
    %v412 = vadd.f32 %v352, %v406
    %v413 = vadd.f32 %v353, %v407
    %v414 = vadd.f32 %v354, %v408
    %415 = vset.pattern.permute.xlu0 3
    %416 = vperm.xlu0 %415, %v100
    %v417 = vpop.permute.xlu0 %416
    %419 = vset.pattern.permute.xlu0 3
    %420 = vperm.xlu0 %419, %v101
    %v421 = vpop.permute.xlu0 %420
    %423 = vset.pattern.permute.xlu0 3
    %424 = vperm.xlu0 %423, %v102
    %v425 = vpop.permute.xlu0 %424
    %427 = vset.pattern.permute.xlu0 3
    %428 = vperm.xlu0 %427, %v103
    %v429 = vpop.permute.xlu0 %428
    %431 = vset.pattern.permute.xlu0 3
    %432 = vperm.xlu0 %431, %v104
    %v433 = vpop.permute.xlu0 %432
    %435 = vset.pattern.permute.xlu0 3
    %436 = vperm.xlu0 %435, %v105
    %v437 = vpop.permute.xlu0 %436
    %v439 = vlaneseq
    %v440 = vshrl.u32 %v439, 7
    %v441 = vsub.s32 3, %v440
    %v442 = vrot.slane %v207, %v441
    %v443 = vlaneseq
    %v444 = vshrl.u32 %v443, 7
    %v445 = vsub.s32 3, %v444
    %v446 = vrot.slane %v212, %v445
    %v447 = vlaneseq
    %v448 = vshrl.u32 %v447, 7
    %v449 = vsub.s32 3, %v448
    %v450 = vrot.slane %v217, %v449
    %v451 = vlaneseq
    %v452 = vshrl.u32 %v451, 7
    %v453 = vsub.s32 3, %v452
    %v454 = vrot.slane %v222, %v453
    %v455 = vlaneseq
    %v456 = vshrl.u32 %v455, 7
    %v457 = vsub.s32 3, %v456
    %v458 = vrot.slane %v227, %v457
    %v459 = vlaneseq
    %v460 = vshrl.u32 %v459, 7
    %v461 = vsub.s32 3, %v460
    %v462 = vrot.slane %v232, %v461
    %v463 = vmul.f32 %v417, %v442
    %v464 = vmul.f32 %v421, %v446
    %v465 = vmul.f32 %v425, %v450
    %v466 = vmul.f32 %v429, %v454
    %v467 = vmul.f32 %v433, %v458
    %v468 = vmul.f32 %v437, %v462
    %v469 = vadd.f32 %v409, %v463
    %v470 = vadd.f32 %v410, %v464
    %v471 = vadd.f32 %v411, %v465
    %v472 = vadd.f32 %v412, %v466
    %v473 = vadd.f32 %v413, %v467
    %v474 = vadd.f32 %v414, %v468
    %475 = vset.pattern.permute.xlu0 4
    %476 = vperm.xlu0 %475, %v100
    %v477 = vpop.permute.xlu0 %476
    %479 = vset.pattern.permute.xlu0 4
    %480 = vperm.xlu0 %479, %v101
    %v481 = vpop.permute.xlu0 %480
    %483 = vset.pattern.permute.xlu0 4
    %484 = vperm.xlu0 %483, %v102
    %v485 = vpop.permute.xlu0 %484
    %487 = vset.pattern.permute.xlu0 4
    %488 = vperm.xlu0 %487, %v103
    %v489 = vpop.permute.xlu0 %488
    %491 = vset.pattern.permute.xlu0 4
    %492 = vperm.xlu0 %491, %v104
    %v493 = vpop.permute.xlu0 %492
    %495 = vset.pattern.permute.xlu0 4
    %496 = vperm.xlu0 %495, %v105
    %v497 = vpop.permute.xlu0 %496
    %v499 = vlaneseq
    %v500 = vshrl.u32 %v499, 7
    %v501 = vsub.s32 4, %v500
    %v502 = vrot.slane %v207, %v501
    %v503 = vlaneseq
    %v504 = vshrl.u32 %v503, 7
    %v505 = vsub.s32 4, %v504
    %v506 = vrot.slane %v212, %v505
    %v507 = vlaneseq
    %v508 = vshrl.u32 %v507, 7
    %v509 = vsub.s32 4, %v508
    %v510 = vrot.slane %v217, %v509
    %v511 = vlaneseq
    %v512 = vshrl.u32 %v511, 7
    %v513 = vsub.s32 4, %v512
    %v514 = vrot.slane %v222, %v513
    %v515 = vlaneseq
    %v516 = vshrl.u32 %v515, 7
    %v517 = vsub.s32 4, %v516
    %v518 = vrot.slane %v227, %v517
    %v519 = vlaneseq
    %v520 = vshrl.u32 %v519, 7
    %v521 = vsub.s32 4, %v520
    %v522 = vrot.slane %v232, %v521
    %v523 = vmul.f32 %v477, %v502
    %v524 = vmul.f32 %v481, %v506
    %v525 = vmul.f32 %v485, %v510
    %v526 = vmul.f32 %v489, %v514
    %v527 = vmul.f32 %v493, %v518
    %v528 = vmul.f32 %v497, %v522
    %v529 = vadd.f32 %v469, %v523
    %v530 = vadd.f32 %v470, %v524
    %v531 = vadd.f32 %v471, %v525
    %v532 = vadd.f32 %v472, %v526
    %v533 = vadd.f32 %v473, %v527
    %v534 = vadd.f32 %v474, %v528
    %535 = vset.pattern.permute.xlu0 5
    %536 = vperm.xlu0 %535, %v100
    %v537 = vpop.permute.xlu0 %536
    %539 = vset.pattern.permute.xlu0 5
    %540 = vperm.xlu0 %539, %v101
    %v541 = vpop.permute.xlu0 %540
    %543 = vset.pattern.permute.xlu0 5
    %544 = vperm.xlu0 %543, %v102
    %v545 = vpop.permute.xlu0 %544
    %547 = vset.pattern.permute.xlu0 5
    %548 = vperm.xlu0 %547, %v103
    %v549 = vpop.permute.xlu0 %548
    %551 = vset.pattern.permute.xlu0 5
    %552 = vperm.xlu0 %551, %v104
    %v553 = vpop.permute.xlu0 %552
    %555 = vset.pattern.permute.xlu0 5
    %556 = vperm.xlu0 %555, %v105
    %v557 = vpop.permute.xlu0 %556
    %v559 = vlaneseq
    %v560 = vshrl.u32 %v559, 7
    %v561 = vsub.s32 5, %v560
    %v562 = vrot.slane %v207, %v561
    %v563 = vlaneseq
    %v564 = vshrl.u32 %v563, 7
    %v565 = vsub.s32 5, %v564
    %v566 = vrot.slane %v212, %v565
    %v567 = vlaneseq
    %v568 = vshrl.u32 %v567, 7
    %v569 = vsub.s32 5, %v568
    %v570 = vrot.slane %v217, %v569
    %v571 = vlaneseq
    %v572 = vshrl.u32 %v571, 7
    %v573 = vsub.s32 5, %v572
    %v574 = vrot.slane %v222, %v573
    %v575 = vlaneseq
    %v576 = vshrl.u32 %v575, 7
    %v577 = vsub.s32 5, %v576
    %v578 = vrot.slane %v227, %v577
    %v579 = vlaneseq
    %v580 = vshrl.u32 %v579, 7
    %v581 = vsub.s32 5, %v580
    %v582 = vrot.slane %v232, %v581
    %v583 = vmul.f32 %v537, %v562
    %v584 = vmul.f32 %v541, %v566
    %v585 = vmul.f32 %v545, %v570
    %v586 = vmul.f32 %v549, %v574
    %v587 = vmul.f32 %v553, %v578
    %v588 = vmul.f32 %v557, %v582
    %v589 = vadd.f32 %v529, %v583
    %v590 = vadd.f32 %v530, %v584
    %v591 = vadd.f32 %v531, %v585
    %v592 = vadd.f32 %v532, %v586
    %v593 = vadd.f32 %v533, %v587
    %v594 = vadd.f32 %v534, %v588
    %595 = vset.pattern.permute.xlu0 6
    %596 = vperm.xlu0 %595, %v100
    %v597 = vpop.permute.xlu0 %596
    %599 = vset.pattern.permute.xlu0 6
    %600 = vperm.xlu0 %599, %v101
    %v601 = vpop.permute.xlu0 %600
    %603 = vset.pattern.permute.xlu0 6
    %604 = vperm.xlu0 %603, %v102
    %v605 = vpop.permute.xlu0 %604
    %607 = vset.pattern.permute.xlu0 6
    %608 = vperm.xlu0 %607, %v103
    %v609 = vpop.permute.xlu0 %608
    %611 = vset.pattern.permute.xlu0 6
    %612 = vperm.xlu0 %611, %v104
    %v613 = vpop.permute.xlu0 %612
    %615 = vset.pattern.permute.xlu0 6
    %616 = vperm.xlu0 %615, %v105
    %v617 = vpop.permute.xlu0 %616
    %v619 = vlaneseq
    %v620 = vshrl.u32 %v619, 7
    %v621 = vsub.s32 6, %v620
    %v622 = vrot.slane %v207, %v621
    %v623 = vlaneseq
    %v624 = vshrl.u32 %v623, 7
    %v625 = vsub.s32 6, %v624
    %v626 = vrot.slane %v212, %v625
    %v627 = vlaneseq
    %v628 = vshrl.u32 %v627, 7
    %v629 = vsub.s32 6, %v628
    %v630 = vrot.slane %v217, %v629
    %v631 = vlaneseq
    %v632 = vshrl.u32 %v631, 7
    %v633 = vsub.s32 6, %v632
    %v634 = vrot.slane %v222, %v633
    %v635 = vlaneseq
    %v636 = vshrl.u32 %v635, 7
    %v637 = vsub.s32 6, %v636
    %v638 = vrot.slane %v227, %v637
    %v639 = vlaneseq
    %v640 = vshrl.u32 %v639, 7
    %v641 = vsub.s32 6, %v640
    %v642 = vrot.slane %v232, %v641
    %v643 = vmul.f32 %v597, %v622
    %v644 = vmul.f32 %v601, %v626
    %v645 = vmul.f32 %v605, %v630
    %v646 = vmul.f32 %v609, %v634
    %v647 = vmul.f32 %v613, %v638
    %v648 = vmul.f32 %v617, %v642
    %v649 = vadd.f32 %v589, %v643
    %v650 = vadd.f32 %v590, %v644
    %v651 = vadd.f32 %v591, %v645
    %v652 = vadd.f32 %v592, %v646
    %v653 = vadd.f32 %v593, %v647
    %v654 = vadd.f32 %v594, %v648
    %655 = vset.pattern.permute.xlu0 7
    %656 = vperm.xlu0 %655, %v100
    %v657 = vpop.permute.xlu0 %656
    %659 = vset.pattern.permute.xlu0 7
    %660 = vperm.xlu0 %659, %v101
    %v661 = vpop.permute.xlu0 %660
    %663 = vset.pattern.permute.xlu0 7
    %664 = vperm.xlu0 %663, %v102
    %v665 = vpop.permute.xlu0 %664
    %667 = vset.pattern.permute.xlu0 7
    %668 = vperm.xlu0 %667, %v103
    %v669 = vpop.permute.xlu0 %668
    %671 = vset.pattern.permute.xlu0 7
    %672 = vperm.xlu0 %671, %v104
    %v673 = vpop.permute.xlu0 %672
    %675 = vset.pattern.permute.xlu0 7
    %676 = vperm.xlu0 %675, %v105
    %v677 = vpop.permute.xlu0 %676
    %v679 = vlaneseq
    %v680 = vshrl.u32 %v679, 7
    %v681 = vsub.s32 7, %v680
    %v682 = vrot.slane %v207, %v681
    %v683 = vlaneseq
    %v684 = vshrl.u32 %v683, 7
    %v685 = vsub.s32 7, %v684
    %v686 = vrot.slane %v212, %v685
    %v687 = vlaneseq
    %v688 = vshrl.u32 %v687, 7
    %v689 = vsub.s32 7, %v688
    %v690 = vrot.slane %v217, %v689
    %v691 = vlaneseq
    %v692 = vshrl.u32 %v691, 7
    %v693 = vsub.s32 7, %v692
    %v694 = vrot.slane %v222, %v693
    %v695 = vlaneseq
    %v696 = vshrl.u32 %v695, 7
    %v697 = vsub.s32 7, %v696
    %v698 = vrot.slane %v227, %v697
    %v699 = vlaneseq
    %v700 = vshrl.u32 %v699, 7
    %v701 = vsub.s32 7, %v700
    %v702 = vrot.slane %v232, %v701
    %v703 = vmul.f32 %v657, %v682
    %v704 = vmul.f32 %v661, %v686
    %v705 = vmul.f32 %v665, %v690
    %v706 = vmul.f32 %v669, %v694
    %v707 = vmul.f32 %v673, %v698
    %v708 = vmul.f32 %v677, %v702
    %v709 = vadd.f32 %v649, %v703
    %v710 = vadd.f32 %v650, %v704
    %v711 = vadd.f32 %v651, %v705
    %v712 = vadd.f32 %v652, %v706
    %v713 = vadd.f32 %v653, %v707
    %v714 = vadd.f32 %v654, %v708
    %v715 = vld [vmem:[#allocation7] sm:$0xff]
    %v716 = vld [vmem:[#allocation7 + $0x8] sm:$0xff]
    %v717 = vld [vmem:[#allocation7 + $0x10] sm:$0xff]
    %v718 = vld [vmem:[#allocation7 + $0x18] sm:$0xff]
    %v719 = vlaneseq
    %v720 = vshrl.u32 %v719, 7
    %v721 = vsub.s32 0, %v720
    %v722 = vrot.slane %v107, %v721
    %v724 = vsel %vm121, %v709, 0
    %v727 = vsel %vm121, %v710, 0
    %v730 = vsel %vm121, %v711, 0
    %v733 = vsel %vm121, %v712, 0
    %v736 = vsel %vm121, %v713, 0
    %v739 = vsel %vm121, %v714, 0
    %741 = vmatprep.subr.mxu0 0.0
    %742 = vmatpush1.msra.mxu0 0.0
    %743 = vmatprep.subr.mxu0 0.0
    %744 = vmatpush1.msra.mxu0 0.0
    %745 = vmatprep.subr.mxu0 0.0
    %746 = vmatpush1.msra.mxu0 0.0
    %747 = vmatprep.subr.mxu0 0.0
    %748 = vmatpush1.msra.mxu0 0.0
    %749 = vmatprep.subr.mxu0 0.0
    %750 = vmatpush1.msra.mxu0 0.0
    %751 = vmatprep.subr.mxu0 0.0
    %752 = vmatpush1.msra.mxu0 0.0
    %753 = vmatprep.subr.mxu0 0.0
    %754 = vmatpush1.msra.mxu0 0.0
    %755 = vmatprep.subr.mxu0 0.0
    %756 = vmatpush1.msra.mxu0 0.0
    %757 = vmatprep.subr.mxu0 0.0
    %758 = vmatpush1.msra.mxu0 0.0
    %759 = vmatprep.subr.mxu0 0.0
    %760 = vmatpush1.msra.mxu0 0.0
    %761 = vmatprep.subr.mxu0 0.0
    %762 = vmatpush1.msra.mxu0 0.0
    %763 = vmatprep.subr.mxu0 0.0
    %764 = vmatpush1.msra.mxu0 0.0
    %765 = vmatprep.subr.mxu0 0.0
    %766 = vmatpush1.msra.mxu0 %v718
    %767 = vmatprep.subr.mxu0 0.0
    %768 = vmatpush1.msra.mxu0 %v717
    %769 = vmatprep.subr.mxu0 0.0
    %770 = vmatpush1.msra.mxu0 %v716
    %771 = vmatprep.subr.mxu0 0.0
    %772 = vmatpush1.msra.mxu0 %v715
    %773 = vmatprep.subr.mxu0 0.0
    %774 = vmatpush2.msra.mxu0 0.0
    %775 = vmatprep.subr.mxu0 0.0
    %776 = vmatpush2.msra.mxu0 0.0
    %777 = vmatprep.subr.mxu0 0.0
    %778 = vmatpush2.msra.mxu0 0.0
    %779 = vmatprep.subr.mxu0 0.0
    %780 = vmatpush2.msra.mxu0 0.0
    %781 = vmatprep.subr.mxu0 0.0
    %782 = vmatpush2.msra.mxu0 0.0
    %783 = vmatprep.subr.mxu0 0.0
    %784 = vmatpush2.msra.mxu0 0.0
    %785 = vmatprep.subr.mxu0 0.0
    %786 = vmatpush2.msra.mxu0 0.0
    %787 = vmatprep.subr.mxu0 0.0
    %788 = vmatpush2.msra.mxu0 0.0
    %789 = vmatprep.subr.mxu0 0.0
    %790 = vmatpush2.msra.mxu0 0.0
    %791 = vmatprep.subr.mxu0 0.0
    %792 = vmatpush2.msra.mxu0 0.0
    %793 = vmatprep.subr.mxu0 0.0
    %794 = vmatpush2.msra.mxu0 0.0
    %795 = vmatprep.subr.mxu0 0.0
    %796 = vmatpush2.msra.mxu0 0.0
    %797 = vmatprep.subr.mxu0 0.0
    %798 = vmatpush2.msra.mxu0 0.0
    %799 = vmatprep.subr.mxu0 0.0
    %800 = vmatpush2.msra.mxu0 0.0
    %801 = vmatprep.subr.mxu0 0.0
    %802 = vmatpush2.msra.mxu0 0.0
    %803 = vmatprep.subr.mxu0 0.0
    %804 = vmatpush2.msra.mxu0 0.0
    %805 = vmatprep.mubr.f32.mxu0 0.0
    %806 = vmatmul.mubr.f32.gmra.mxu0 %v724
    %v807 = vpop.f32.mrf.mxu0
    %v808 = vadd.f32 %v722, %v807
    %v809 = vpop.f32.mrf.mxu0
    %810 = vmatprep.mubr.f32.mxu0 0.0
    %811 = vmatmul.mubr.f32.gmra.mxu0 %v727
    %v812 = vpop.f32.mrf.mxu0
    %v813 = vadd.f32 %v722, %v812
    %v814 = vpop.f32.mrf.mxu0
    %815 = vmatprep.mubr.f32.mxu0 0.0
    %816 = vmatmul.mubr.f32.gmra.mxu0 %v730
    %v817 = vpop.f32.mrf.mxu0
    %v818 = vadd.f32 %v722, %v817
    %v819 = vpop.f32.mrf.mxu0
    %820 = vmatprep.mubr.f32.mxu0 0.0
    %821 = vmatmul.mubr.f32.gmra.mxu0 %v733
    %v822 = vpop.f32.mrf.mxu0
    %v823 = vadd.f32 %v722, %v822
    %v824 = vpop.f32.mrf.mxu0
    %825 = vmatprep.mubr.f32.mxu0 0.0
    %826 = vmatmul.mubr.f32.gmra.mxu0 %v736
    %v827 = vpop.f32.mrf.mxu0
    %v828 = vadd.f32 %v722, %v827
    %v829 = vpop.f32.mrf.mxu0
    %830 = vmatprep.mubr.f32.mxu0 0.0
    %831 = vmatmul.mubr.f32.gmra.mxu0 %v739
    %v832 = vpop.f32.mrf.mxu0
    %v833 = vadd.f32 %v722, %v832
    %v834 = vpop.f32.mrf.mxu0
    %835 = vdwg.mxu0
    %v836 = vadd.f32 %v88, %v808
    %v837 = vadd.f32 %v89, %v813
    %v838 = vadd.f32 %v90, %v818
    %v839 = vadd.f32 %v91, %v823
    %v840 = vadd.f32 %v92, %v828
    %v841 = vadd.f32 %v93, %v833
    %v842 = vsel %vm121, %v836, 0.0
    %843 = vadd.xlane.f32.xlu0 %v842
    %v844 = vpop.xlane.xlu0 %843
    %v845 = vsel %vm121, %v837, 0.0
    %846 = vadd.xlane.f32.xlu0 %v845
    %v847 = vpop.xlane.xlu0 %846
    %v848 = vsel %vm121, %v838, 0.0
    %849 = vadd.xlane.f32.xlu0 %v848
    %v850 = vpop.xlane.xlu0 %849
    %v851 = vsel %vm121, %v839, 0.0
    %852 = vadd.xlane.f32.xlu0 %v851
    %v853 = vpop.xlane.xlu0 %852
    %v854 = vsel %vm121, %v840, 0.0
    %855 = vadd.xlane.f32.xlu0 %v854
    %v856 = vpop.xlane.xlu0 %855
    %v857 = vsel %vm121, %v841, 0.0
    %858 = vadd.xlane.f32.xlu0 %v857
    %v859 = vpop.xlane.xlu0 %858
    %v860 = vrcp.pop 32.0
    %v861 = vmul.f32 %v844, %v860
    %v862 = vmul.f32 %v847, %v860
    %v863 = vmul.f32 %v850, %v860
    %v864 = vmul.f32 %v853, %v860
    %v865 = vmul.f32 %v856, %v860
    %v866 = vmul.f32 %v859, %v860
    %v867 = vsub.f32 %v836, %v861
    %v868 = vsub.f32 %v837, %v862
    %v869 = vsub.f32 %v838, %v863
    %v870 = vsub.f32 %v839, %v864
    %v871 = vsub.f32 %v840, %v865
    %v872 = vsub.f32 %v841, %v866
    %v873 = vmul.f32 %v867, %v867
    %v874 = vmul.f32 %v868, %v868
    %v875 = vmul.f32 %v869, %v869
    %v876 = vmul.f32 %v870, %v870
    %v877 = vmul.f32 %v871, %v871
    %v878 = vmul.f32 %v872, %v872
    %v879 = vsel %vm121, %v873, 0.0
    %880 = vadd.xlane.f32.xlu0 %v879
    %v881 = vpop.xlane.xlu0 %880
    %v882 = vsel %vm121, %v874, 0.0
    %883 = vadd.xlane.f32.xlu0 %v882
    %v884 = vpop.xlane.xlu0 %883
    %v885 = vsel %vm121, %v875, 0.0
    %886 = vadd.xlane.f32.xlu0 %v885
    %v887 = vpop.xlane.xlu0 %886
    %v888 = vsel %vm121, %v876, 0.0
    %889 = vadd.xlane.f32.xlu0 %v888
    %v890 = vpop.xlane.xlu0 %889
    %v891 = vsel %vm121, %v877, 0.0
    %892 = vadd.xlane.f32.xlu0 %v891
    %v893 = vpop.xlane.xlu0 %892
    %v894 = vsel %vm121, %v878, 0.0
    %895 = vadd.xlane.f32.xlu0 %v894
    %v896 = vpop.xlane.xlu0 %895
    %v897 = vmul.f32 %v881, %v860
    %v898 = vmul.f32 %v884, %v860
    %v899 = vmul.f32 %v887, %v860
    %v900 = vmul.f32 %v890, %v860
    %v901 = vmul.f32 %v893, %v860
    %v902 = vmul.f32 %v896, %v860
    %v903 = vadd.f32 %v897, 1e-05
    %v904 = vadd.f32 %v898, 1e-05
    %v905 = vadd.f32 %v899, 1e-05
    %v906 = vadd.f32 %v900, 1e-05
    %v907 = vadd.f32 %v901, 1e-05
    %v908 = vadd.f32 %v902, 1e-05
    %v909 = vrsqrt.pop %v903
    %v910 = vrsqrt.pop %v904
    %v911 = vrsqrt.pop %v905
    %v912 = vrsqrt.pop %v906
    %v913 = vrsqrt.pop %v907
    %v914 = vrsqrt.pop %v908
    %v915 = vmul.f32 %v867, %v909
    %v916 = vmul.f32 %v868, %v910
    %v917 = vmul.f32 %v869, %v911
    %v918 = vmul.f32 %v870, %v912
    %v919 = vmul.f32 %v871, %v913
    %v920 = vmul.f32 %v872, %v914
    %v921 = vlaneseq
    %v922 = vshrl.u32 %v921, 7
    %v923 = vsub.s32 0, %v922
    %v924 = vrot.slane %v109, %v923
    %v925 = vmul.f32 %v915, %v924
    %v926 = vmul.f32 %v916, %v924
    %v927 = vmul.f32 %v917, %v924
    %v928 = vmul.f32 %v918, %v924
    %v929 = vmul.f32 %v919, %v924
    %v930 = vmul.f32 %v920, %v924
    %v931 = vlaneseq
    %v932 = vshrl.u32 %v931, 7
    %v933 = vsub.s32 0, %v932
    %v934 = vrot.slane %v110, %v933
    %v935 = vadd.f32 %v925, %v934
    %v936 = vadd.f32 %v926, %v934
    %v937 = vadd.f32 %v927, %v934
    %v938 = vadd.f32 %v928, %v934
    %v939 = vadd.f32 %v929, %v934
    %v940 = vadd.f32 %v930, %v934
    %v941 = vld [vmem:[#allocation8] sm:$0xff]
    %v942 = vld [vmem:[#allocation8 + $0x8] sm:$0xff]
    %v943 = vld [vmem:[#allocation8 + $0x10] sm:$0xff]
    %v944 = vld [vmem:[#allocation8 + $0x18] sm:$0xff]
    %v945 = vld [vmem:[%s7] sm:$0x1]
    %v947 = vlaneseq
    %v948 = vshrl.u32 %v947, 7
    %v949 = vsub.s32 0, %v948
    %v950 = vrot.slane %v945, %v949
    %v953 = vsel %vm121, %v935, 0
    %v956 = vsel %vm121, %v936, 0
    %v959 = vsel %vm121, %v937, 0
    %v962 = vsel %vm121, %v938, 0
    %v965 = vsel %vm121, %v939, 0
    %v968 = vsel %vm121, %v940, 0
    %970 = vmatprep.subr.mxu0 0.0
    %971 = vmatpush1.msra.mxu0 0.0
    %972 = vmatprep.subr.mxu0 0.0
    %973 = vmatpush1.msra.mxu0 0.0
    %974 = vmatprep.subr.mxu0 0.0
    %975 = vmatpush1.msra.mxu0 0.0
    %976 = vmatprep.subr.mxu0 0.0
    %977 = vmatpush1.msra.mxu0 0.0
    %978 = vmatprep.subr.mxu0 0.0
    %979 = vmatpush1.msra.mxu0 0.0
    %980 = vmatprep.subr.mxu0 0.0
    %981 = vmatpush1.msra.mxu0 0.0
    %982 = vmatprep.subr.mxu0 0.0
    %983 = vmatpush1.msra.mxu0 0.0
    %984 = vmatprep.subr.mxu0 0.0
    %985 = vmatpush1.msra.mxu0 0.0
    %986 = vmatprep.subr.mxu0 0.0
    %987 = vmatpush1.msra.mxu0 0.0
    %988 = vmatprep.subr.mxu0 0.0
    %989 = vmatpush1.msra.mxu0 0.0
    %990 = vmatprep.subr.mxu0 0.0
    %991 = vmatpush1.msra.mxu0 0.0
    %992 = vmatprep.subr.mxu0 0.0
    %993 = vmatpush1.msra.mxu0 0.0
    %994 = vmatprep.subr.mxu0 0.0
    %995 = vmatpush1.msra.mxu0 %v944
    %996 = vmatprep.subr.mxu0 0.0
    %997 = vmatpush1.msra.mxu0 %v943
    %998 = vmatprep.subr.mxu0 0.0
    %999 = vmatpush1.msra.mxu0 %v942
    %1000 = vmatprep.subr.mxu0 0.0
    %1001 = vmatpush1.msra.mxu0 %v941
    %1002 = vmatprep.subr.mxu0 0.0
    %1003 = vmatpush2.msra.mxu0 0.0
    %1004 = vmatprep.subr.mxu0 0.0
    %1005 = vmatpush2.msra.mxu0 0.0
    %1006 = vmatprep.subr.mxu0 0.0
    %1007 = vmatpush2.msra.mxu0 0.0
    %1008 = vmatprep.subr.mxu0 0.0
    %1009 = vmatpush2.msra.mxu0 0.0
    %1010 = vmatprep.subr.mxu0 0.0
    %1011 = vmatpush2.msra.mxu0 0.0
    %1012 = vmatprep.subr.mxu0 0.0
    %1013 = vmatpush2.msra.mxu0 0.0
    %1014 = vmatprep.subr.mxu0 0.0
    %1015 = vmatpush2.msra.mxu0 0.0
    %1016 = vmatprep.subr.mxu0 0.0
    %1017 = vmatpush2.msra.mxu0 0.0
    %1018 = vmatprep.subr.mxu0 0.0
    %1019 = vmatpush2.msra.mxu0 0.0
    %1020 = vmatprep.subr.mxu0 0.0
    %1021 = vmatpush2.msra.mxu0 0.0
    %1022 = vmatprep.subr.mxu0 0.0
    %1023 = vmatpush2.msra.mxu0 0.0
    %1024 = vmatprep.subr.mxu0 0.0
    %1025 = vmatpush2.msra.mxu0 0.0
    %1026 = vmatprep.subr.mxu0 0.0
    %1027 = vmatpush2.msra.mxu0 0.0
    %1028 = vmatprep.subr.mxu0 0.0
    %1029 = vmatpush2.msra.mxu0 0.0
    %1030 = vmatprep.subr.mxu0 0.0
    %1031 = vmatpush2.msra.mxu0 0.0
    %1032 = vmatprep.subr.mxu0 0.0
    %1033 = vmatpush2.msra.mxu0 0.0
    %1034 = vmatprep.mubr.f32.mxu0 0.0
    %1035 = vmatmul.mubr.f32.gmra.mxu0 %v953
    %v1036 = vpop.f32.mrf.mxu0
    %v1037 = vadd.f32 %v950, %v1036
    %v1038 = vpop.f32.mrf.mxu0
    %1039 = vmatprep.mubr.f32.mxu0 0.0
    %1040 = vmatmul.mubr.f32.gmra.mxu0 %v956
    %v1041 = vpop.f32.mrf.mxu0
    %v1042 = vadd.f32 %v950, %v1041
    %v1043 = vpop.f32.mrf.mxu0
    %1044 = vmatprep.mubr.f32.mxu0 0.0
    %1045 = vmatmul.mubr.f32.gmra.mxu0 %v959
    %v1046 = vpop.f32.mrf.mxu0
    %v1047 = vadd.f32 %v950, %v1046
    %v1048 = vpop.f32.mrf.mxu0
    %1049 = vmatprep.mubr.f32.mxu0 0.0
    %1050 = vmatmul.mubr.f32.gmra.mxu0 %v962
    %v1051 = vpop.f32.mrf.mxu0
    %v1052 = vadd.f32 %v950, %v1051
    %v1053 = vpop.f32.mrf.mxu0
    %1054 = vmatprep.mubr.f32.mxu0 0.0
    %1055 = vmatmul.mubr.f32.gmra.mxu0 %v965
    %v1056 = vpop.f32.mrf.mxu0
    %v1057 = vadd.f32 %v950, %v1056
    %v1058 = vpop.f32.mrf.mxu0
    %1059 = vmatprep.mubr.f32.mxu0 0.0
    %1060 = vmatmul.mubr.f32.gmra.mxu0 %v968
    %v1061 = vpop.f32.mrf.mxu0
    %v1062 = vadd.f32 %v950, %v1061
    %v1063 = vpop.f32.mrf.mxu0
    %1064 = vdwg.mxu0
    %v1065 = vmax.f32 %v1037, 0.0
    %v1066 = vmax.f32 %v1042, 0.0
    %v1067 = vmax.f32 %v1047, 0.0
    %v1068 = vmax.f32 %v1052, 0.0
    %v1069 = vmax.f32 %v1057, 0.0
    %v1070 = vmax.f32 %v1062, 0.0
    %v1071 = vld [vmem:[%s6] sm:$0xff]
    %v1072 = vld [vmem:[%s6 + $0x8] sm:$0xff]
    %v1073 = vld [vmem:[%s6 + $0x10] sm:$0xff]
    %v1074 = vld [vmem:[%s6 + $0x18] sm:$0xff]
    %v1075 = vld [vmem:[%s6 + $0x20] sm:$0xff]
    %v1076 = vld [vmem:[%s6 + $0x28] sm:$0xff]
    %v1077 = vld [vmem:[%s6 + $0x30] sm:$0xff]
    %v1078 = vld [vmem:[%s6 + $0x38] sm:$0xff]
    %v1079 = vlaneseq
    %v1080 = vshrl.u32 %v1079, 7
    %v1081 = vsub.s32 0, %v1080
    %v1082 = vrot.slane %v108, %v1081
    %vm1083 = vcmask 523264
    %v1085 = vsel %vm1083, %v1065, 0
    %v1088 = vsel %vm1083, %v1066, 0
    %v1091 = vsel %vm1083, %v1067, 0
    %v1094 = vsel %vm1083, %v1068, 0
    %v1097 = vsel %vm1083, %v1069, 0
    %v1100 = vsel %vm1083, %v1070, 0
    %1102 = vmatprep.subr.mxu0 0.0
    %1103 = vmatpush1.msra.mxu0 0.0
    %1104 = vmatprep.subr.mxu0 0.0
    %1105 = vmatpush1.msra.mxu0 0.0
    %1106 = vmatprep.subr.mxu0 0.0
    %1107 = vmatpush1.msra.mxu0 0.0
    %1108 = vmatprep.subr.mxu0 0.0
    %1109 = vmatpush1.msra.mxu0 0.0
    %1110 = vmatprep.subr.mxu0 0.0
    %1111 = vmatpush1.msra.mxu0 0.0
    %1112 = vmatprep.subr.mxu0 0.0
    %1113 = vmatpush1.msra.mxu0 0.0
    %1114 = vmatprep.subr.mxu0 0.0
    %1115 = vmatpush1.msra.mxu0 0.0
    %1116 = vmatprep.subr.mxu0 0.0
    %1117 = vmatpush1.msra.mxu0 0.0
    %1118 = vmatprep.subr.mxu0 0.0
    %1119 = vmatpush1.msra.mxu0 %v1078
    %1120 = vmatprep.subr.mxu0 0.0
    %1121 = vmatpush1.msra.mxu0 %v1077
    %1122 = vmatprep.subr.mxu0 0.0
    %1123 = vmatpush1.msra.mxu0 %v1076
    %1124 = vmatprep.subr.mxu0 0.0
    %1125 = vmatpush1.msra.mxu0 %v1075
    %1126 = vmatprep.subr.mxu0 0.0
    %1127 = vmatpush1.msra.mxu0 %v1074
    %1128 = vmatprep.subr.mxu0 0.0
    %1129 = vmatpush1.msra.mxu0 %v1073
    %1130 = vmatprep.subr.mxu0 0.0
    %1131 = vmatpush1.msra.mxu0 %v1072
    %1132 = vmatprep.subr.mxu0 0.0
    %1133 = vmatpush1.msra.mxu0 %v1071
    %1134 = vmatprep.subr.mxu0 0.0
    %1135 = vmatpush2.msra.mxu0 0.0
    %1136 = vmatprep.subr.mxu0 0.0
    %1137 = vmatpush2.msra.mxu0 0.0
    %1138 = vmatprep.subr.mxu0 0.0
    %1139 = vmatpush2.msra.mxu0 0.0
    %1140 = vmatprep.subr.mxu0 0.0
    %1141 = vmatpush2.msra.mxu0 0.0
    %1142 = vmatprep.subr.mxu0 0.0
    %1143 = vmatpush2.msra.mxu0 0.0
    %1144 = vmatprep.subr.mxu0 0.0
    %1145 = vmatpush2.msra.mxu0 0.0
    %1146 = vmatprep.subr.mxu0 0.0
    %1147 = vmatpush2.msra.mxu0 0.0
    %1148 = vmatprep.subr.mxu0 0.0
    %1149 = vmatpush2.msra.mxu0 0.0
    %1150 = vmatprep.subr.mxu0 0.0
    %1151 = vmatpush2.msra.mxu0 0.0
    %1152 = vmatprep.subr.mxu0 0.0
    %1153 = vmatpush2.msra.mxu0 0.0
    %1154 = vmatprep.subr.mxu0 0.0
    %1155 = vmatpush2.msra.mxu0 0.0
    %1156 = vmatprep.subr.mxu0 0.0
    %1157 = vmatpush2.msra.mxu0 0.0
    %1158 = vmatprep.subr.mxu0 0.0
    %1159 = vmatpush2.msra.mxu0 0.0
    %1160 = vmatprep.subr.mxu0 0.0
    %1161 = vmatpush2.msra.mxu0 0.0
    %1162 = vmatprep.subr.mxu0 0.0
    %1163 = vmatpush2.msra.mxu0 0.0
    %1164 = vmatprep.subr.mxu0 0.0
    %1165 = vmatpush2.msra.mxu0 0.0
    %1166 = vmatprep.mubr.f32.mxu0 0.0
    %1167 = vmatmul.mubr.f32.gmra.mxu0 %v1085
    %v1168 = vpop.f32.mrf.mxu0
    %v1169 = vadd.f32 %v1082, %v1168
    %v1170 = vpop.f32.mrf.mxu0
    %1171 = vmatprep.mubr.f32.mxu0 0.0
    %1172 = vmatmul.mubr.f32.gmra.mxu0 %v1088
    %v1173 = vpop.f32.mrf.mxu0
    %v1174 = vadd.f32 %v1082, %v1173
    %v1175 = vpop.f32.mrf.mxu0
    %1176 = vmatprep.mubr.f32.mxu0 0.0
    %1177 = vmatmul.mubr.f32.gmra.mxu0 %v1091
    %v1178 = vpop.f32.mrf.mxu0
    %v1179 = vadd.f32 %v1082, %v1178
    %v1180 = vpop.f32.mrf.mxu0
    %1181 = vmatprep.mubr.f32.mxu0 0.0
    %1182 = vmatmul.mubr.f32.gmra.mxu0 %v1094
    %v1183 = vpop.f32.mrf.mxu0
    %v1184 = vadd.f32 %v1082, %v1183
    %v1185 = vpop.f32.mrf.mxu0
    %1186 = vmatprep.mubr.f32.mxu0 0.0
    %1187 = vmatmul.mubr.f32.gmra.mxu0 %v1097
    %v1188 = vpop.f32.mrf.mxu0
    %v1189 = vadd.f32 %v1082, %v1188
    %v1190 = vpop.f32.mrf.mxu0
    %1191 = vmatprep.mubr.f32.mxu0 0.0
    %1192 = vmatmul.mubr.f32.gmra.mxu0 %v1100
    %v1193 = vpop.f32.mrf.mxu0
    %v1194 = vadd.f32 %v1082, %v1193
    %v1195 = vpop.f32.mrf.mxu0
    %1196 = vdwg.mxu0
    %v1197 = vadd.f32 %v935, %v1169
    %v1198 = vadd.f32 %v936, %v1174
    %v1199 = vadd.f32 %v937, %v1179
    %v1200 = vadd.f32 %v938, %v1184
    %v1201 = vadd.f32 %v939, %v1189
    %v1202 = vadd.f32 %v940, %v1194
    %v1203 = vsel %vm121, %v1197, 0.0
    %1204 = vadd.xlane.f32.xlu0 %v1203
    %v1205 = vpop.xlane.xlu0 %1204
    %v1206 = vsel %vm121, %v1198, 0.0
    %1207 = vadd.xlane.f32.xlu0 %v1206
    %v1208 = vpop.xlane.xlu0 %1207
    %v1209 = vsel %vm121, %v1199, 0.0
    %1210 = vadd.xlane.f32.xlu0 %v1209
    %v1211 = vpop.xlane.xlu0 %1210
    %v1212 = vsel %vm121, %v1200, 0.0
    %1213 = vadd.xlane.f32.xlu0 %v1212
    %v1214 = vpop.xlane.xlu0 %1213
    %v1215 = vsel %vm121, %v1201, 0.0
    %1216 = vadd.xlane.f32.xlu0 %v1215
    %v1217 = vpop.xlane.xlu0 %1216
    %v1218 = vsel %vm121, %v1202, 0.0
    %1219 = vadd.xlane.f32.xlu0 %v1218
    %v1220 = vpop.xlane.xlu0 %1219
    %v1221 = vmul.f32 %v1205, %v860
    %v1222 = vmul.f32 %v1208, %v860
    %v1223 = vmul.f32 %v1211, %v860
    %v1224 = vmul.f32 %v1214, %v860
    %v1225 = vmul.f32 %v1217, %v860
    %v1226 = vmul.f32 %v1220, %v860
    %v1227 = vsub.f32 %v1197, %v1221
    %v1228 = vsub.f32 %v1198, %v1222
    %v1229 = vsub.f32 %v1199, %v1223
    %v1230 = vsub.f32 %v1200, %v1224
    %v1231 = vsub.f32 %v1201, %v1225
    %v1232 = vsub.f32 %v1202, %v1226
    %v1233 = vmul.f32 %v1227, %v1227
    %v1234 = vmul.f32 %v1228, %v1228
    %v1235 = vmul.f32 %v1229, %v1229
    %v1236 = vmul.f32 %v1230, %v1230
    %v1237 = vmul.f32 %v1231, %v1231
    %v1238 = vmul.f32 %v1232, %v1232
    %v1239 = vsel %vm121, %v1233, 0.0
    %1240 = vadd.xlane.f32.xlu0 %v1239
    %v1241 = vpop.xlane.xlu0 %1240
    %v1242 = vsel %vm121, %v1234, 0.0
    %1243 = vadd.xlane.f32.xlu0 %v1242
    %v1244 = vpop.xlane.xlu0 %1243
    %v1245 = vsel %vm121, %v1235, 0.0
    %1246 = vadd.xlane.f32.xlu0 %v1245
    %v1247 = vpop.xlane.xlu0 %1246
    %v1248 = vsel %vm121, %v1236, 0.0
    %1249 = vadd.xlane.f32.xlu0 %v1248
    %v1250 = vpop.xlane.xlu0 %1249
    %v1251 = vsel %vm121, %v1237, 0.0
    %1252 = vadd.xlane.f32.xlu0 %v1251
    %v1253 = vpop.xlane.xlu0 %1252
    %v1254 = vsel %vm121, %v1238, 0.0
    %1255 = vadd.xlane.f32.xlu0 %v1254
    %v1256 = vpop.xlane.xlu0 %1255
    %v1257 = vmul.f32 %v1241, %v860
    %v1258 = vmul.f32 %v1244, %v860
    %v1259 = vmul.f32 %v1247, %v860
    %v1260 = vmul.f32 %v1250, %v860
    %v1261 = vmul.f32 %v1253, %v860
    %v1262 = vmul.f32 %v1256, %v860
    %v1263 = vadd.f32 %v1257, 1e-05
    %v1264 = vadd.f32 %v1258, 1e-05
    %v1265 = vadd.f32 %v1259, 1e-05
    %v1266 = vadd.f32 %v1260, 1e-05
    %v1267 = vadd.f32 %v1261, 1e-05
    %v1268 = vadd.f32 %v1262, 1e-05
    %v1269 = vrsqrt.pop %v1263
    %v1270 = vrsqrt.pop %v1264
    %v1271 = vrsqrt.pop %v1265
    %v1272 = vrsqrt.pop %v1266
    %v1273 = vrsqrt.pop %v1267
    %v1274 = vrsqrt.pop %v1268
    %v1275 = vmul.f32 %v1227, %v1269
    %v1276 = vmul.f32 %v1228, %v1270
    %v1277 = vmul.f32 %v1229, %v1271
    %v1278 = vmul.f32 %v1230, %v1272
    %v1279 = vmul.f32 %v1231, %v1273
    %v1280 = vmul.f32 %v1232, %v1274
    %v1281 = vlaneseq
    %v1282 = vshrl.u32 %v1281, 7
    %v1283 = vsub.s32 0, %v1282
    %v1284 = vrot.slane %v111, %v1283
    %v1285 = vmul.f32 %v1275, %v1284
    %v1286 = vmul.f32 %v1276, %v1284
    %v1287 = vmul.f32 %v1277, %v1284
    %v1288 = vmul.f32 %v1278, %v1284
    %v1289 = vmul.f32 %v1279, %v1284
    %v1290 = vmul.f32 %v1280, %v1284
    %v1291 = vlaneseq
    %v1292 = vshrl.u32 %v1291, 7
    %v1293 = vsub.s32 0, %v1292
    %v1294 = vrot.slane %v112, %v1293
    %v1295 = vadd.f32 %v1285, %v1294
    %v1296 = vadd.f32 %v1286, %v1294
    %v1297 = vadd.f32 %v1287, %v1294
    %v1298 = vadd.f32 %v1288, %v1294
    %v1299 = vadd.f32 %v1289, %v1294
    %v1300 = vadd.f32 %v1290, %v1294
    %1301 = vst.msk [vmem:[#allocation10] sm:$0xff] %vm121, %v1295
    %1302 = vst.msk [vmem:[#allocation10 + $0x8] sm:$0xff] %vm121, %v1296
    %1303 = vst.msk [vmem:[#allocation10 + $0x10] sm:$0xff] %vm121, %v1297
    %1304 = vst.msk [vmem:[#allocation10 + $0x18] sm:$0xff] %vm121, %v1298
    %1305 = vst.msk [vmem:[#allocation10 + $0x20] sm:$0xff] %vm121, %v1299
    %1306 = vst.msk [vmem:[#allocation10 + $0x28] sm:$0xff] %vm121, %v1300
    // Predicated region
    $region54: #{tpu_custom_call.1} parent=1 // pred_check
      _
    $region55: #{tpu_custom_call.1} parent=1 // pred_check_branch
      %1308 = sbr.rel (0) target = $region57
    $region56: #{tpu_custom_call.1} parent=1 // pred_region
      %s1310 = ssub.s32 768, 768
      %1311 = vsyncadd [#allocation4], %s1310
      %s1312 = sshll.u32 [#allocation10], 4
      %s1313 = int_to_ptr.vmem [resolvable:$true] %s1312
      %1318 = dma.vmem_to_hbm [thread:$0]  %s1313, 768, %s9, [#allocation4], 128, 128, 8
    $region57: #{tpu_custom_call.1} parent=1 // pred_fallthru
      _
    // Predicated region
    $region58: #{tpu_custom_call.1} parent=1 // pred_check
      _
    $region59: #{tpu_custom_call.1} parent=1 // pred_check_branch
      %1320 = sbr.rel (0) target = $region61
    $region60: #{tpu_custom_call.1} parent=1 // pred_region
      %1321 = dma.done [#allocation4], 768
    $region61: #{tpu_custom_call.1} parent=1 // pred_fallthru
      _
    %1322 = vsyncpa [#allocation3], 1
    %1323 = vsyncpa [#allocation6], 1
    %1324 = vsyncpa [#allocation9], 1
    %1325 = vsyncpa [#allocation4], 1

</llo_original>
